<compile_context>
chip_gen: v5e
topology: v5e:2x2
jax: 0.10.0
libtpu: 0.0.40
codegen_flags: <defaults>
</compile_context>

<pallas_src>
import functools
import numpy as np
import jax
import jax.numpy as jnp
from jax import lax
from jax.experimental import pallas as pl
from jax.experimental.pallas import tpu as pltpu


# ----------------------------- helpers ------------------------------------ #

def _full_spec(shape):
    nd = len(shape)
    return pl.BlockSpec(shape, lambda *_: (0,) * nd)


def _layernorm(x, w, b, eps=1e-5):
    mu = jnp.mean(x, axis=-1, keepdims=True)
    var = jnp.mean((x - mu) ** 2, axis=-1, keepdims=True)
    return (x - mu) * lax.rsqrt(var + eps) * w + b


def positional_encoding(seq_len, d_model):
    pe = np.zeros((seq_len, d_model), dtype=np.float32)
    position = np.arange(seq_len, dtype=np.float32)[:, None]
    div_term = np.exp(np.arange(0, d_model, 2, dtype=np.float32)
                      * (-np.log(10000.0) / d_model))
    pe[:, 0::2] = np.sin(position * div_term)
    pe[:, 1::2] = np.cos(position * div_term)
    return jnp.asarray(pe)


def _mm(a, w):
    """a @ w.T with bf16 MXU operands and f32 accumulation."""
    return lax.dot_general(a.astype(jnp.bfloat16), w.astype(jnp.bfloat16),
                           (((1,), (1,)), ((), ())),
                           preferred_element_type=jnp.float32)


# ----------------------------- fused Pallas kernel ------------------------- #

def _fused_forward_kernel(x_ref, pe_ref, emb_w_ref, emb_b_ref,
                          wqkv_ref, bqkv_ref, wo_ref, bo_ref,
                          ln1w_ref, ln1b_ref, w1_ref, b1_ref,
                          w2_ref, b2_ref, ln2w_ref, ln2b_ref,
                          dec_w_ref, dec_b_ref, o_ref,
                          *, nhead, num_layers):
    E = emb_w_ref.shape[0]
    Dh = E // nhead
    scale = 1.0 / np.sqrt(Dh)

    x = x_ref[0]                                                    # (S, Din)

    # embedding + positional encoding (fused)
    h = _mm(x, emb_w_ref[...]) + emb_b_ref[...] + pe_ref[...]       # (S, E)

    # encoder layers (post-norm, ReLU FF; dropout == identity / eval mode)
    for l in range(num_layers):
        qkv = _mm(h, wqkv_ref[l]) + bqkv_ref[l]                     # (S, 3E)

        # per-head attention; head outputs packed into contiguous lane slices
        # so the output projection runs as ONE E-deep matmul.
        heads = []
        for hd in range(nhead):
            q = qkv[:, hd * Dh:(hd + 1) * Dh] * scale               # fold 1/sqrt(Dh)
            k = qkv[:, E + hd * Dh:E + (hd + 1) * Dh]
            v = qkv[:, 2 * E + hd * Dh:2 * E + (hd + 1) * Dh]
            s = lax.dot_general(q.astype(jnp.bfloat16), k.astype(jnp.bfloat16),
                                (((1,), (1,)), ((), ())),
                                preferred_element_type=jnp.float32)  # (S, S)
            s = s - jnp.max(s, axis=-1, keepdims=True)
            p = jnp.exp(s)
            p = p * pl.reciprocal(jnp.sum(p, axis=-1, keepdims=True), approx=True)
            heads.append(lax.dot_general(
                p.astype(jnp.bfloat16), v.astype(jnp.bfloat16),
                (((1,), (0,)), ((), ())),
                preferred_element_type=jnp.float32))                 # (S, Dh)
        attn = jnp.concatenate(heads, axis=-1)                       # (S, E)
        attn = _mm(attn, wo_ref[l]) + bo_ref[l]                      # single out-proj

        h = _layernorm(h + attn, ln1w_ref[l], ln1b_ref[l])

        ff = jnp.maximum(_mm(h, w1_ref[l]) + b1_ref[l], 0.0)
        ff = _mm(ff, w2_ref[l]) + b2_ref[l]
        h = _layernorm(h + ff, ln2w_ref[l], ln2b_ref[l])

    # decoder head, folded into the same kernel
    o_ref[0] = (_mm(h, dec_w_ref[...]) + dec_b_ref[...]).astype(o_ref.dtype)


# ----------------------------- wrapper ------------------------------------- #

def market_transformer_forward(src, params, nhead):
    """src: (S, B, input_dim) -> (S, B, output_dim)."""
    S, B, Din = src.shape
    E = params['emb_w'].shape[0]
    L = params['in_proj_w'].shape[0]
    Dout = params['dec_w'].shape[0]

    pe = positional_encoding(S, E)                                   # (S, E)
    x = jnp.transpose(src, (1, 0, 2))                                # (B, S, Din)

    weights = (
        pe,
        params['emb_w'], params['emb_b'][None, :],
        params['in_proj_w'], params['in_proj_b'][:, None, :],
        params['out_proj_w'], params['out_proj_b'][:, None, :],
        params['ln1_w'][:, None, :], params['ln1_b'][:, None, :],
        params['ff_w1'], params['ff_b1'][:, None, :],
        params['ff_w2'], params['ff_b2'][:, None, :],
        params['ln2_w'][:, None, :], params['ln2_b'][:, None, :],
        params['dec_w'], params['dec_b'][None, :],
    )

    kernel = functools.partial(_fused_forward_kernel, nhead=nhead, num_layers=L)
    in_specs = [pl.BlockSpec((1, S, Din), lambda b: (b, 0, 0))] + \
               [_full_spec(w.shape) for w in weights]

    out = pl.pallas_call(
        kernel,
        out_shape=jax.ShapeDtypeStruct((B, S, Dout), jnp.float32),
        grid=(B,),
        in_specs=in_specs,
        out_specs=pl.BlockSpec((1, S, Dout), lambda b: (b, 0, 0)),
        compiler_params=pltpu.CompilerParams(
            dimension_semantics=("parallel",)),
    )(x, *weights)

    return jnp.transpose(out, (1, 0, 2))                             # (S, B, Dout)


# ----------------------------- parameters ---------------------------------- #

def init_params(key, input_dim, output_dim, d_model, nhead, num_layers, dim_ff):
    keys = jax.random.split(key, 2 + num_layers)

    def lin(k, out_d, in_d, scale=0.05):
        kw, kb = jax.random.split(k)
        return (jax.random.normal(kw, (out_d, in_d), jnp.float32) * scale,
                jax.random.normal(kb, (out_d,), jnp.float32) * scale)

    emb_w, emb_b = lin(keys[0], d_model, input_dim)
    dec_w, dec_b = lin(keys[1], output_dim, d_model)

    in_w, in_b, out_w, out_b = [], [], [], []
    w1s, b1s, w2s, b2s = [], [], [], []
    for i in range(num_layers):
        k = jax.random.split(keys[2 + i], 4)
        a, b = lin(k[0], 3 * d_model, d_model); in_w.append(a); in_b.append(b)
        a, b = lin(k[1], d_model, d_model);     out_w.append(a); out_b.append(b)
        a, b = lin(k[2], dim_ff, d_model);      w1s.append(a);  b1s.append(b)
        a, b = lin(k[3], d_model, dim_ff);      w2s.append(a);  b2s.append(b)

    stack = lambda xs: jnp.stack(xs, axis=0)
    return dict(
        emb_w=emb_w, emb_b=emb_b, dec_w=dec_w, dec_b=dec_b,
        in_proj_w=stack(in_w), in_proj_b=stack(in_b),
        out_proj_w=stack(out_w), out_proj_b=stack(out_b),
        ff_w1=stack(w1s), ff_b1=stack(b1s),
        ff_w2=stack(w2s), ff_b2=stack(b2s),
        ln1_w=jnp.ones((num_layers, d_model), jnp.float32),
        ln1_b=jnp.zeros((num_layers, d_model), jnp.float32),
        ln2_w=jnp.ones((num_layers, d_model), jnp.float32),
        ln2_b=jnp.zeros((num_layers, d_model), jnp.float32))


# ----------------------------- pure-JAX reference -------------------------- #

def reference_forward(src, params, nhead):
    S, B, Din = src.shape
    E = params['emb_w'].shape[0]
    H, Dh = nhead, E // nhead
    L = params['in_proj_w'].shape[0]

    x = src @ params['emb_w'].T + params['emb_b']
    x = x + positional_encoding(S, E)[:, None, :]
    x = x.transpose(1, 0, 2)                                         # (B, S, E)

    for l in range(L):
        qkv = x @ params['in_proj_w'][l].T + params['in_proj_b'][l]
        q, k, v = jnp.split(qkv, 3, axis=-1)
        sh = lambda t: t.reshape(B, S, H, Dh).transpose(0, 2, 1, 3)
        q = sh(q) * (1.0 / np.sqrt(Dh))
        k, v = sh(k), sh(v)
        a = jax.nn.softmax(jnp.einsum('bhsd,bhtd->bhst', q, k), axis=-1)
        o = jnp.einsum('bhst,bhtd->bhsd', a, v).transpose(0, 2, 1, 3).reshape(B, S, E)
        o = o @ params['out_proj_w'][l].T + params['out_proj_b'][l]
        x = _layernorm(x + o, params['ln1_w'][l], params['ln1_b'][l])
        hh = jax.nn.relu(x @ params['ff_w1'][l].T + params['ff_b1'][l])
        ff = hh @ params['ff_w2'][l].T + params['ff_b2'][l]
        x = _layernorm(x + ff, params['ln2_w'][l], params['ln2_b'][l])

    y = x @ params['dec_w'].T + params['dec_b']
    return y.transpose(1, 0, 2)


# ----------------------------- main ---------------------------------------- #

if __name__ == "__main__":
    S, B = 8, 2
    input_dim, output_dim = 16, 4
    d_model, nhead, num_layers, dim_ff = 32, 4, 2, 64

    key = jax.random.PRNGKey(0)
    kparam, kx = jax.random.split(key)
    params = init_params(kparam, input_dim, output_dim, d_model, nhead,
                         num_layers, dim_ff)
    src = jax.random.normal(kx, (S, B, input_dim), jnp.float32)

    fwd = jax.jit(functools.partial(market_transformer_forward, nhead=nhead))
    out = jax.block_until_ready(fwd(src, params))
    assert out.shape == (S, B, output_dim)

    ref = reference_forward(src, params, nhead)
    # Tolerances account for bf16 MXU operands (f32 accumulation / elementwise).
    np.testing.assert_allclose(np.asarray(out), np.asarray(ref),
                               rtol=2e-2, atol=1e-2)
    print("KERNEL_OK")
</pallas_src>

<mosaic_0001>
module attributes {stable_mosaic.version = 11 : i64} {
  func.func @_fused_forward_kernel(%arg0: i32, %arg1: memref<1x8x16xf32, #tpu.memory_space<vmem>>, %arg2: memref<8x32xf32, #tpu.memory_space<vmem>>, %arg3: memref<32x16xf32, #tpu.memory_space<vmem>>, %arg4: memref<1x32xf32, #tpu.memory_space<vmem>>, %arg5: memref<2x96x32xf32, #tpu.memory_space<vmem>>, %arg6: memref<2x1x96xf32, #tpu.memory_space<vmem>>, %arg7: memref<2x32x32xf32, #tpu.memory_space<vmem>>, %arg8: memref<2x1x32xf32, #tpu.memory_space<vmem>>, %arg9: memref<2x1x32xf32, #tpu.memory_space<vmem>>, %arg10: memref<2x1x32xf32, #tpu.memory_space<vmem>>, %arg11: memref<2x64x32xf32, #tpu.memory_space<vmem>>, %arg12: memref<2x1x64xf32, #tpu.memory_space<vmem>>, %arg13: memref<2x32x64xf32, #tpu.memory_space<vmem>>, %arg14: memref<2x1x32xf32, #tpu.memory_space<vmem>>, %arg15: memref<2x1x32xf32, #tpu.memory_space<vmem>>, %arg16: memref<2x1x32xf32, #tpu.memory_space<vmem>>, %arg17: memref<4x32xf32, #tpu.memory_space<vmem>>, %arg18: memref<1x4xf32, #tpu.memory_space<vmem>>, %arg19: memref<1x8x4xf32, #tpu.memory_space<vmem>>) attributes {dimension_semantics = [#tpu.dimension_semantics<parallel>], iteration_bounds = array<i64: 2>, scalar_prefetch = 0 : i64, scratch_operands = 0 : i64, tpu.core_type = #tpu.core_type<tc>, window_params = [{transform_indices = @transform_0, window_bounds = array<i64: 1, 8, 16>}, {pipeline_mode = #tpu.pipeline_mode<synchronous>, transform_indices = @transform_1, window_bounds = array<i64: 8, 32>}, {pipeline_mode = #tpu.pipeline_mode<synchronous>, transform_indices = @transform_2, window_bounds = array<i64: 32, 16>}, {pipeline_mode = #tpu.pipeline_mode<synchronous>, transform_indices = @transform_3, window_bounds = array<i64: 1, 32>}, {pipeline_mode = #tpu.pipeline_mode<synchronous>, transform_indices = @transform_4, window_bounds = array<i64: 2, 96, 32>}, {pipeline_mode = #tpu.pipeline_mode<synchronous>, transform_indices = @transform_5, window_bounds = array<i64: 2, 1, 96>}, {pipeline_mode = #tpu.pipeline_mode<synchronous>, transform_indices = @transform_6, window_bounds = array<i64: 2, 32, 32>}, {pipeline_mode = #tpu.pipeline_mode<synchronous>, transform_indices = @transform_7, window_bounds = array<i64: 2, 1, 32>}, {pipeline_mode = #tpu.pipeline_mode<synchronous>, transform_indices = @transform_8, window_bounds = array<i64: 2, 1, 32>}, {pipeline_mode = #tpu.pipeline_mode<synchronous>, transform_indices = @transform_9, window_bounds = array<i64: 2, 1, 32>}, {pipeline_mode = #tpu.pipeline_mode<synchronous>, transform_indices = @transform_10, window_bounds = array<i64: 2, 64, 32>}, {pipeline_mode = #tpu.pipeline_mode<synchronous>, transform_indices = @transform_11, window_bounds = array<i64: 2, 1, 64>}, {pipeline_mode = #tpu.pipeline_mode<synchronous>, transform_indices = @transform_12, window_bounds = array<i64: 2, 32, 64>}, {pipeline_mode = #tpu.pipeline_mode<synchronous>, transform_indices = @transform_13, window_bounds = array<i64: 2, 1, 32>}, {pipeline_mode = #tpu.pipeline_mode<synchronous>, transform_indices = @transform_14, window_bounds = array<i64: 2, 1, 32>}, {pipeline_mode = #tpu.pipeline_mode<synchronous>, transform_indices = @transform_15, window_bounds = array<i64: 2, 1, 32>}, {pipeline_mode = #tpu.pipeline_mode<synchronous>, transform_indices = @transform_16, window_bounds = array<i64: 4, 32>}, {pipeline_mode = #tpu.pipeline_mode<synchronous>, transform_indices = @transform_17, window_bounds = array<i64: 1, 4>}, {transform_indices = @transform_18, window_bounds = array<i64: 1, 8, 4>}]} {
    %c0 = arith.constant 0 : index
    %c0_0 = arith.constant 0 : index
    %c0_1 = arith.constant 0 : index
    %0 = vector.load %arg1[%c0, %c0_0, %c0_1] : memref<1x8x16xf32, #tpu.memory_space<vmem>>, vector<1x8x16xf32>
    %1 = vector.shape_cast %0 : vector<1x8x16xf32> to vector<8x16xf32>
    %c0_2 = arith.constant 0 : index
    %c0_3 = arith.constant 0 : index
    %2 = vector.load %arg3[%c0_2, %c0_3] : memref<32x16xf32, #tpu.memory_space<vmem>>, vector<32x16xf32>
    %3 = arith.truncf %1 : vector<8x16xf32> to vector<8x16xbf16>
    %4 = arith.truncf %2 : vector<32x16xf32> to vector<32x16xbf16>
    %cst = arith.constant dense<0.000000e+00> : vector<8x32xf32>
    %5 = tpu.matmul %3, %4, %cst {dimension_numbers = #tpu.dot_dimension_numbers<[1], [1], [0], [0], [0, 0, 1, 0], [], []>} : vector<8x16xbf16>, vector<32x16xbf16>, vector<8x32xf32> -> vector<8x32xf32>
    %c0_4 = arith.constant 0 : index
    %c0_5 = arith.constant 0 : index
    %6 = vector.load %arg4[%c0_4, %c0_5] : memref<1x32xf32, #tpu.memory_space<vmem>>, vector<1x32xf32>
    %7 = vector.broadcast %6 : vector<1x32xf32> to vector<8x32xf32>
    %8 = arith.addf %5, %7 : vector<8x32xf32>
    %c0_6 = arith.constant 0 : index
    %c0_7 = arith.constant 0 : index
    %9 = vector.load %arg2[%c0_6, %c0_7] : memref<8x32xf32, #tpu.memory_space<vmem>>, vector<8x32xf32>
    %10 = arith.addf %8, %9 : vector<8x32xf32>
    %c0_8 = arith.constant 0 : index
    %c0_9 = arith.constant 0 : index
    %c0_10 = arith.constant 0 : index
    %11 = vector.load %arg5[%c0_8, %c0_9, %c0_10] : memref<2x96x32xf32, #tpu.memory_space<vmem>>, vector<1x96x32xf32>
    %12 = vector.shape_cast %11 : vector<1x96x32xf32> to vector<96x32xf32>
    %13 = arith.truncf %10 : vector<8x32xf32> to vector<8x32xbf16>
    %14 = arith.truncf %12 : vector<96x32xf32> to vector<96x32xbf16>
    %cst_11 = arith.constant dense<0.000000e+00> : vector<8x96xf32>
    %15 = tpu.matmul %13, %14, %cst_11 {dimension_numbers = #tpu.dot_dimension_numbers<[1], [1], [0], [0], [0, 0, 1, 0], [], []>} : vector<8x32xbf16>, vector<96x32xbf16>, vector<8x96xf32> -> vector<8x96xf32>
    %c0_12 = arith.constant 0 : index
    %c0_13 = arith.constant 0 : index
    %c0_14 = arith.constant 0 : index
    %16 = vector.load %arg6[%c0_12, %c0_13, %c0_14] : memref<2x1x96xf32, #tpu.memory_space<vmem>>, vector<1x1x96xf32>
    %17 = vector.shape_cast %16 : vector<1x1x96xf32> to vector<1x96xf32>
    %18 = vector.broadcast %17 : vector<1x96xf32> to vector<8x96xf32>
    %19 = arith.addf %15, %18 : vector<8x96xf32>
    %20 = vector.extract_strided_slice %19 {offsets = [0, 0], sizes = [8, 8], strides = [1, 1]} : vector<8x96xf32> to vector<8x8xf32>
    %cst_15 = arith.constant 0.353553385 : f32
    %21 = vector.broadcast %cst_15 : f32 to vector<8x8xf32>
    %22 = arith.mulf %20, %21 : vector<8x8xf32>
    %23 = vector.extract_strided_slice %19 {offsets = [0, 32], sizes = [8, 8], strides = [1, 1]} : vector<8x96xf32> to vector<8x8xf32>
    %24 = vector.extract_strided_slice %19 {offsets = [0, 64], sizes = [8, 8], strides = [1, 1]} : vector<8x96xf32> to vector<8x8xf32>
    %25 = arith.truncf %22 : vector<8x8xf32> to vector<8x8xbf16>
    %26 = arith.truncf %23 : vector<8x8xf32> to vector<8x8xbf16>
    %cst_16 = arith.constant dense<0.000000e+00> : vector<8x8xf32>
    %27 = tpu.matmul %25, %26, %cst_16 {dimension_numbers = #tpu.dot_dimension_numbers<[1], [1], [0], [0], [0, 0, 1, 0], [], []>} : vector<8x8xbf16>, vector<8x8xbf16>, vector<8x8xf32> -> vector<8x8xf32>
    %cst_17 = arith.constant dense<0xFF800000> : vector<8xf32>
    %28 = vector.multi_reduction <maximumf>, %27, %cst_17 [1] : vector<8x8xf32> to vector<8xf32>
    %29 = vector.shape_cast %28 : vector<8xf32> to vector<8x1xf32>
    %30 = vector.broadcast %29 : vector<8x1xf32> to vector<8x8xf32>
    %31 = arith.subf %27, %30 : vector<8x8xf32>
    %32 = math.exp %31 : vector<8x8xf32>
    %cst_18 = arith.constant dense<0.000000e+00> : vector<8xf32>
    %33 = vector.multi_reduction <add>, %32, %cst_18 [1] : vector<8x8xf32> to vector<8xf32>
    %34 = vector.shape_cast %33 : vector<8xf32> to vector<8x1xf32>
    %35 = tpu.reciprocal %34 {approx = true} : vector<8x1xf32> -> vector<8x1xf32>
    %36 = vector.broadcast %35 : vector<8x1xf32> to vector<8x8xf32>
    %37 = arith.mulf %32, %36 : vector<8x8xf32>
    %38 = arith.truncf %37 : vector<8x8xf32> to vector<8x8xbf16>
    %39 = arith.truncf %24 : vector<8x8xf32> to vector<8x8xbf16>
    %cst_19 = arith.constant dense<0.000000e+00> : vector<8x8xf32>
    %40 = tpu.matmul %38, %39, %cst_19 {dimension_numbers = #tpu.dot_dimension_numbers<[1], [0], [0], [1], [0, 0, 1, 1], [], []>} : vector<8x8xbf16>, vector<8x8xbf16>, vector<8x8xf32> -> vector<8x8xf32>
    %41 = vector.extract_strided_slice %19 {offsets = [0, 8], sizes = [8, 8], strides = [1, 1]} : vector<8x96xf32> to vector<8x8xf32>
    %cst_20 = arith.constant 0.353553385 : f32
    %42 = vector.broadcast %cst_20 : f32 to vector<8x8xf32>
    %43 = arith.mulf %41, %42 : vector<8x8xf32>
    %44 = vector.extract_strided_slice %19 {offsets = [0, 40], sizes = [8, 8], strides = [1, 1]} : vector<8x96xf32> to vector<8x8xf32>
    %45 = vector.extract_strided_slice %19 {offsets = [0, 72], sizes = [8, 8], strides = [1, 1]} : vector<8x96xf32> to vector<8x8xf32>
    %46 = arith.truncf %43 : vector<8x8xf32> to vector<8x8xbf16>
    %47 = arith.truncf %44 : vector<8x8xf32> to vector<8x8xbf16>
    %cst_21 = arith.constant dense<0.000000e+00> : vector<8x8xf32>
    %48 = tpu.matmul %46, %47, %cst_21 {dimension_numbers = #tpu.dot_dimension_numbers<[1], [1], [0], [0], [0, 0, 1, 0], [], []>} : vector<8x8xbf16>, vector<8x8xbf16>, vector<8x8xf32> -> vector<8x8xf32>
    %cst_22 = arith.constant dense<0xFF800000> : vector<8xf32>
    %49 = vector.multi_reduction <maximumf>, %48, %cst_22 [1] : vector<8x8xf32> to vector<8xf32>
    %50 = vector.shape_cast %49 : vector<8xf32> to vector<8x1xf32>
    %51 = vector.broadcast %50 : vector<8x1xf32> to vector<8x8xf32>
    %52 = arith.subf %48, %51 : vector<8x8xf32>
    %53 = math.exp %52 : vector<8x8xf32>
    %cst_23 = arith.constant dense<0.000000e+00> : vector<8xf32>
    %54 = vector.multi_reduction <add>, %53, %cst_23 [1] : vector<8x8xf32> to vector<8xf32>
    %55 = vector.shape_cast %54 : vector<8xf32> to vector<8x1xf32>
    %56 = tpu.reciprocal %55 {approx = true} : vector<8x1xf32> -> vector<8x1xf32>
    %57 = vector.broadcast %56 : vector<8x1xf32> to vector<8x8xf32>
    %58 = arith.mulf %53, %57 : vector<8x8xf32>
    %59 = arith.truncf %58 : vector<8x8xf32> to vector<8x8xbf16>
    %60 = arith.truncf %45 : vector<8x8xf32> to vector<8x8xbf16>
    %cst_24 = arith.constant dense<0.000000e+00> : vector<8x8xf32>
    %61 = tpu.matmul %59, %60, %cst_24 {dimension_numbers = #tpu.dot_dimension_numbers<[1], [0], [0], [1], [0, 0, 1, 1], [], []>} : vector<8x8xbf16>, vector<8x8xbf16>, vector<8x8xf32> -> vector<8x8xf32>
    %62 = vector.extract_strided_slice %19 {offsets = [0, 16], sizes = [8, 8], strides = [1, 1]} : vector<8x96xf32> to vector<8x8xf32>
    %cst_25 = arith.constant 0.353553385 : f32
    %63 = vector.broadcast %cst_25 : f32 to vector<8x8xf32>
    %64 = arith.mulf %62, %63 : vector<8x8xf32>
    %65 = vector.extract_strided_slice %19 {offsets = [0, 48], sizes = [8, 8], strides = [1, 1]} : vector<8x96xf32> to vector<8x8xf32>
    %66 = vector.extract_strided_slice %19 {offsets = [0, 80], sizes = [8, 8], strides = [1, 1]} : vector<8x96xf32> to vector<8x8xf32>
    %67 = arith.truncf %64 : vector<8x8xf32> to vector<8x8xbf16>
    %68 = arith.truncf %65 : vector<8x8xf32> to vector<8x8xbf16>
    %cst_26 = arith.constant dense<0.000000e+00> : vector<8x8xf32>
    %69 = tpu.matmul %67, %68, %cst_26 {dimension_numbers = #tpu.dot_dimension_numbers<[1], [1], [0], [0], [0, 0, 1, 0], [], []>} : vector<8x8xbf16>, vector<8x8xbf16>, vector<8x8xf32> -> vector<8x8xf32>
    %cst_27 = arith.constant dense<0xFF800000> : vector<8xf32>
    %70 = vector.multi_reduction <maximumf>, %69, %cst_27 [1] : vector<8x8xf32> to vector<8xf32>
    %71 = vector.shape_cast %70 : vector<8xf32> to vector<8x1xf32>
    %72 = vector.broadcast %71 : vector<8x1xf32> to vector<8x8xf32>
    %73 = arith.subf %69, %72 : vector<8x8xf32>
    %74 = math.exp %73 : vector<8x8xf32>
    %cst_28 = arith.constant dense<0.000000e+00> : vector<8xf32>
    %75 = vector.multi_reduction <add>, %74, %cst_28 [1] : vector<8x8xf32> to vector<8xf32>
    %76 = vector.shape_cast %75 : vector<8xf32> to vector<8x1xf32>
    %77 = tpu.reciprocal %76 {approx = true} : vector<8x1xf32> -> vector<8x1xf32>
    %78 = vector.broadcast %77 : vector<8x1xf32> to vector<8x8xf32>
    %79 = arith.mulf %74, %78 : vector<8x8xf32>
    %80 = arith.truncf %79 : vector<8x8xf32> to vector<8x8xbf16>
    %81 = arith.truncf %66 : vector<8x8xf32> to vector<8x8xbf16>
    %cst_29 = arith.constant dense<0.000000e+00> : vector<8x8xf32>
    %82 = tpu.matmul %80, %81, %cst_29 {dimension_numbers = #tpu.dot_dimension_numbers<[1], [0], [0], [1], [0, 0, 1, 1], [], []>} : vector<8x8xbf16>, vector<8x8xbf16>, vector<8x8xf32> -> vector<8x8xf32>
    %83 = vector.extract_strided_slice %19 {offsets = [0, 24], sizes = [8, 8], strides = [1, 1]} : vector<8x96xf32> to vector<8x8xf32>
    %cst_30 = arith.constant 0.353553385 : f32
    %84 = vector.broadcast %cst_30 : f32 to vector<8x8xf32>
    %85 = arith.mulf %83, %84 : vector<8x8xf32>
    %86 = vector.extract_strided_slice %19 {offsets = [0, 56], sizes = [8, 8], strides = [1, 1]} : vector<8x96xf32> to vector<8x8xf32>
    %87 = vector.extract_strided_slice %19 {offsets = [0, 88], sizes = [8, 8], strides = [1, 1]} : vector<8x96xf32> to vector<8x8xf32>
    %88 = arith.truncf %85 : vector<8x8xf32> to vector<8x8xbf16>
    %89 = arith.truncf %86 : vector<8x8xf32> to vector<8x8xbf16>
    %cst_31 = arith.constant dense<0.000000e+00> : vector<8x8xf32>
    %90 = tpu.matmul %88, %89, %cst_31 {dimension_numbers = #tpu.dot_dimension_numbers<[1], [1], [0], [0], [0, 0, 1, 0], [], []>} : vector<8x8xbf16>, vector<8x8xbf16>, vector<8x8xf32> -> vector<8x8xf32>
    %cst_32 = arith.constant dense<0xFF800000> : vector<8xf32>
    %91 = vector.multi_reduction <maximumf>, %90, %cst_32 [1] : vector<8x8xf32> to vector<8xf32>
    %92 = vector.shape_cast %91 : vector<8xf32> to vector<8x1xf32>
    %93 = vector.broadcast %92 : vector<8x1xf32> to vector<8x8xf32>
    %94 = arith.subf %90, %93 : vector<8x8xf32>
    %95 = math.exp %94 : vector<8x8xf32>
    %cst_33 = arith.constant dense<0.000000e+00> : vector<8xf32>
    %96 = vector.multi_reduction <add>, %95, %cst_33 [1] : vector<8x8xf32> to vector<8xf32>
    %97 = vector.shape_cast %96 : vector<8xf32> to vector<8x1xf32>
    %98 = tpu.reciprocal %97 {approx = true} : vector<8x1xf32> -> vector<8x1xf32>
    %99 = vector.broadcast %98 : vector<8x1xf32> to vector<8x8xf32>
    %100 = arith.mulf %95, %99 : vector<8x8xf32>
    %101 = arith.truncf %100 : vector<8x8xf32> to vector<8x8xbf16>
    %102 = arith.truncf %87 : vector<8x8xf32> to vector<8x8xbf16>
    %cst_34 = arith.constant dense<0.000000e+00> : vector<8x8xf32>
    %103 = tpu.matmul %101, %102, %cst_34 {dimension_numbers = #tpu.dot_dimension_numbers<[1], [0], [0], [1], [0, 0, 1, 1], [], []>} : vector<8x8xbf16>, vector<8x8xbf16>, vector<8x8xf32> -> vector<8x8xf32>
    %104 = tpu.concatenate %40, %61, %82, %103 in 1 : vector<8x8xf32>, vector<8x8xf32>, vector<8x8xf32>, vector<8x8xf32> -> vector<8x32xf32>
    %c0_35 = arith.constant 0 : index
    %c0_36 = arith.constant 0 : index
    %c0_37 = arith.constant 0 : index
    %105 = vector.load %arg7[%c0_35, %c0_36, %c0_37] : memref<2x32x32xf32, #tpu.memory_space<vmem>>, vector<1x32x32xf32>
    %106 = vector.shape_cast %105 : vector<1x32x32xf32> to vector<32x32xf32>
    %107 = arith.truncf %104 : vector<8x32xf32> to vector<8x32xbf16>
    %108 = arith.truncf %106 : vector<32x32xf32> to vector<32x32xbf16>
    %cst_38 = arith.constant dense<0.000000e+00> : vector<8x32xf32>
    %109 = tpu.matmul %107, %108, %cst_38 {dimension_numbers = #tpu.dot_dimension_numbers<[1], [1], [0], [0], [0, 0, 1, 0], [], []>} : vector<8x32xbf16>, vector<32x32xbf16>, vector<8x32xf32> -> vector<8x32xf32>
    %c0_39 = arith.constant 0 : index
    %c0_40 = arith.constant 0 : index
    %c0_41 = arith.constant 0 : index
    %110 = vector.load %arg8[%c0_39, %c0_40, %c0_41] : memref<2x1x32xf32, #tpu.memory_space<vmem>>, vector<1x1x32xf32>
    %111 = vector.shape_cast %110 : vector<1x1x32xf32> to vector<1x32xf32>
    %112 = vector.broadcast %111 : vector<1x32xf32> to vector<8x32xf32>
    %113 = arith.addf %109, %112 : vector<8x32xf32>
    %114 = arith.addf %10, %113 : vector<8x32xf32>
    %c0_42 = arith.constant 0 : index
    %c0_43 = arith.constant 0 : index
    %c0_44 = arith.constant 0 : index
    %115 = vector.load %arg9[%c0_42, %c0_43, %c0_44] : memref<2x1x32xf32, #tpu.memory_space<vmem>>, vector<1x1x32xf32>
    %116 = vector.shape_cast %115 : vector<1x1x32xf32> to vector<1x32xf32>
    %c0_45 = arith.constant 0 : index
    %c0_46 = arith.constant 0 : index
    %c0_47 = arith.constant 0 : index
    %117 = vector.load %arg10[%c0_45, %c0_46, %c0_47] : memref<2x1x32xf32, #tpu.memory_space<vmem>>, vector<1x1x32xf32>
    %118 = vector.shape_cast %117 : vector<1x1x32xf32> to vector<1x32xf32>
    %cst_48 = arith.constant dense<0.000000e+00> : vector<8xf32>
    %119 = vector.multi_reduction <add>, %114, %cst_48 [1] : vector<8x32xf32> to vector<8xf32>
    %120 = vector.shape_cast %119 : vector<8xf32> to vector<8x1xf32>
    %cst_49 = arith.constant 3.200000e+01 : f32
    %121 = vector.broadcast %cst_49 : f32 to vector<8x1xf32>
    %122 = arith.divf %120, %121 : vector<8x1xf32>
    %123 = vector.broadcast %122 : vector<8x1xf32> to vector<8x32xf32>
    %124 = arith.subf %114, %123 : vector<8x32xf32>
    %125 = arith.mulf %124, %124 : vector<8x32xf32>
    %cst_50 = arith.constant dense<0.000000e+00> : vector<8xf32>
    %126 = vector.multi_reduction <add>, %125, %cst_50 [1] : vector<8x32xf32> to vector<8xf32>
    %127 = vector.shape_cast %126 : vector<8xf32> to vector<8x1xf32>
    %cst_51 = arith.constant 3.200000e+01 : f32
    %128 = vector.broadcast %cst_51 : f32 to vector<8x1xf32>
    %129 = arith.divf %127, %128 : vector<8x1xf32>
    %130 = vector.broadcast %122 : vector<8x1xf32> to vector<8x32xf32>
    %131 = arith.subf %114, %130 : vector<8x32xf32>
    %cst_52 = arith.constant 9.99999974E-6 : f32
    %132 = vector.broadcast %cst_52 : f32 to vector<8x1xf32>
    %133 = arith.addf %129, %132 : vector<8x1xf32>
    %134 = math.rsqrt %133 : vector<8x1xf32>
    %135 = vector.broadcast %134 : vector<8x1xf32> to vector<8x32xf32>
    %136 = arith.mulf %131, %135 : vector<8x32xf32>
    %137 = vector.broadcast %116 : vector<1x32xf32> to vector<8x32xf32>
    %138 = arith.mulf %136, %137 : vector<8x32xf32>
    %139 = vector.broadcast %118 : vector<1x32xf32> to vector<8x32xf32>
    %140 = arith.addf %138, %139 : vector<8x32xf32>
    %c0_53 = arith.constant 0 : index
    %c0_54 = arith.constant 0 : index
    %c0_55 = arith.constant 0 : index
    %141 = vector.load %arg11[%c0_53, %c0_54, %c0_55] : memref<2x64x32xf32, #tpu.memory_space<vmem>>, vector<1x64x32xf32>
    %142 = vector.shape_cast %141 : vector<1x64x32xf32> to vector<64x32xf32>
    %143 = arith.truncf %140 : vector<8x32xf32> to vector<8x32xbf16>
    %144 = arith.truncf %142 : vector<64x32xf32> to vector<64x32xbf16>
    %cst_56 = arith.constant dense<0.000000e+00> : vector<8x64xf32>
    %145 = tpu.matmul %143, %144, %cst_56 {dimension_numbers = #tpu.dot_dimension_numbers<[1], [1], [0], [0], [0, 0, 1, 0], [], []>} : vector<8x32xbf16>, vector<64x32xbf16>, vector<8x64xf32> -> vector<8x64xf32>
    %c0_57 = arith.constant 0 : index
    %c0_58 = arith.constant 0 : index
    %c0_59 = arith.constant 0 : index
    %146 = vector.load %arg12[%c0_57, %c0_58, %c0_59] : memref<2x1x64xf32, #tpu.memory_space<vmem>>, vector<1x1x64xf32>
    %147 = vector.shape_cast %146 : vector<1x1x64xf32> to vector<1x64xf32>
    %148 = vector.broadcast %147 : vector<1x64xf32> to vector<8x64xf32>
    %149 = arith.addf %145, %148 : vector<8x64xf32>
    %cst_60 = arith.constant 0.000000e+00 : f32
    %150 = vector.broadcast %cst_60 : f32 to vector<8x64xf32>
    %151 = arith.maximumf %149, %150 : vector<8x64xf32>
    %c0_61 = arith.constant 0 : index
    %c0_62 = arith.constant 0 : index
    %c0_63 = arith.constant 0 : index
    %152 = vector.load %arg13[%c0_61, %c0_62, %c0_63] : memref<2x32x64xf32, #tpu.memory_space<vmem>>, vector<1x32x64xf32>
    %153 = vector.shape_cast %152 : vector<1x32x64xf32> to vector<32x64xf32>
    %154 = arith.truncf %151 : vector<8x64xf32> to vector<8x64xbf16>
    %155 = arith.truncf %153 : vector<32x64xf32> to vector<32x64xbf16>
    %cst_64 = arith.constant dense<0.000000e+00> : vector<8x32xf32>
    %156 = tpu.matmul %154, %155, %cst_64 {dimension_numbers = #tpu.dot_dimension_numbers<[1], [1], [0], [0], [0, 0, 1, 0], [], []>} : vector<8x64xbf16>, vector<32x64xbf16>, vector<8x32xf32> -> vector<8x32xf32>
    %c0_65 = arith.constant 0 : index
    %c0_66 = arith.constant 0 : index
    %c0_67 = arith.constant 0 : index
    %157 = vector.load %arg14[%c0_65, %c0_66, %c0_67] : memref<2x1x32xf32, #tpu.memory_space<vmem>>, vector<1x1x32xf32>
    %158 = vector.shape_cast %157 : vector<1x1x32xf32> to vector<1x32xf32>
    %159 = vector.broadcast %158 : vector<1x32xf32> to vector<8x32xf32>
    %160 = arith.addf %156, %159 : vector<8x32xf32>
    %161 = arith.addf %140, %160 : vector<8x32xf32>
    %c0_68 = arith.constant 0 : index
    %c0_69 = arith.constant 0 : index
    %c0_70 = arith.constant 0 : index
    %162 = vector.load %arg15[%c0_68, %c0_69, %c0_70] : memref<2x1x32xf32, #tpu.memory_space<vmem>>, vector<1x1x32xf32>
    %163 = vector.shape_cast %162 : vector<1x1x32xf32> to vector<1x32xf32>
    %c0_71 = arith.constant 0 : index
    %c0_72 = arith.constant 0 : index
    %c0_73 = arith.constant 0 : index
    %164 = vector.load %arg16[%c0_71, %c0_72, %c0_73] : memref<2x1x32xf32, #tpu.memory_space<vmem>>, vector<1x1x32xf32>
    %165 = vector.shape_cast %164 : vector<1x1x32xf32> to vector<1x32xf32>
    %cst_74 = arith.constant dense<0.000000e+00> : vector<8xf32>
    %166 = vector.multi_reduction <add>, %161, %cst_74 [1] : vector<8x32xf32> to vector<8xf32>
    %167 = vector.shape_cast %166 : vector<8xf32> to vector<8x1xf32>
    %cst_75 = arith.constant 3.200000e+01 : f32
    %168 = vector.broadcast %cst_75 : f32 to vector<8x1xf32>
    %169 = arith.divf %167, %168 : vector<8x1xf32>
    %170 = vector.broadcast %169 : vector<8x1xf32> to vector<8x32xf32>
    %171 = arith.subf %161, %170 : vector<8x32xf32>
    %172 = arith.mulf %171, %171 : vector<8x32xf32>
    %cst_76 = arith.constant dense<0.000000e+00> : vector<8xf32>
    %173 = vector.multi_reduction <add>, %172, %cst_76 [1] : vector<8x32xf32> to vector<8xf32>
    %174 = vector.shape_cast %173 : vector<8xf32> to vector<8x1xf32>
    %cst_77 = arith.constant 3.200000e+01 : f32
    %175 = vector.broadcast %cst_77 : f32 to vector<8x1xf32>
    %176 = arith.divf %174, %175 : vector<8x1xf32>
    %177 = vector.broadcast %169 : vector<8x1xf32> to vector<8x32xf32>
    %178 = arith.subf %161, %177 : vector<8x32xf32>
    %cst_78 = arith.constant 9.99999974E-6 : f32
    %179 = vector.broadcast %cst_78 : f32 to vector<8x1xf32>
    %180 = arith.addf %176, %179 : vector<8x1xf32>
    %181 = math.rsqrt %180 : vector<8x1xf32>
    %182 = vector.broadcast %181 : vector<8x1xf32> to vector<8x32xf32>
    %183 = arith.mulf %178, %182 : vector<8x32xf32>
    %184 = vector.broadcast %163 : vector<1x32xf32> to vector<8x32xf32>
    %185 = arith.mulf %183, %184 : vector<8x32xf32>
    %186 = vector.broadcast %165 : vector<1x32xf32> to vector<8x32xf32>
    %187 = arith.addf %185, %186 : vector<8x32xf32>
    %c1 = arith.constant 1 : index
    %c0_79 = arith.constant 0 : index
    %c0_80 = arith.constant 0 : index
    %188 = vector.load %arg5[%c1, %c0_79, %c0_80] : memref<2x96x32xf32, #tpu.memory_space<vmem>>, vector<1x96x32xf32>
    %189 = vector.shape_cast %188 : vector<1x96x32xf32> to vector<96x32xf32>
    %190 = arith.truncf %187 : vector<8x32xf32> to vector<8x32xbf16>
    %191 = arith.truncf %189 : vector<96x32xf32> to vector<96x32xbf16>
    %cst_81 = arith.constant dense<0.000000e+00> : vector<8x96xf32>
    %192 = tpu.matmul %190, %191, %cst_81 {dimension_numbers = #tpu.dot_dimension_numbers<[1], [1], [0], [0], [0, 0, 1, 0], [], []>} : vector<8x32xbf16>, vector<96x32xbf16>, vector<8x96xf32> -> vector<8x96xf32>
    %c1_82 = arith.constant 1 : index
    %c0_83 = arith.constant 0 : index
    %c0_84 = arith.constant 0 : index
    %193 = vector.load %arg6[%c1_82, %c0_83, %c0_84] : memref<2x1x96xf32, #tpu.memory_space<vmem>>, vector<1x1x96xf32>
    %194 = vector.shape_cast %193 : vector<1x1x96xf32> to vector<1x96xf32>
    %195 = vector.broadcast %194 : vector<1x96xf32> to vector<8x96xf32>
    %196 = arith.addf %192, %195 : vector<8x96xf32>
    %197 = vector.extract_strided_slice %196 {offsets = [0, 0], sizes = [8, 8], strides = [1, 1]} : vector<8x96xf32> to vector<8x8xf32>
    %cst_85 = arith.constant 0.353553385 : f32
    %198 = vector.broadcast %cst_85 : f32 to vector<8x8xf32>
    %199 = arith.mulf %197, %198 : vector<8x8xf32>
    %200 = vector.extract_strided_slice %196 {offsets = [0, 32], sizes = [8, 8], strides = [1, 1]} : vector<8x96xf32> to vector<8x8xf32>
    %201 = vector.extract_strided_slice %196 {offsets = [0, 64], sizes = [8, 8], strides = [1, 1]} : vector<8x96xf32> to vector<8x8xf32>
    %202 = arith.truncf %199 : vector<8x8xf32> to vector<8x8xbf16>
    %203 = arith.truncf %200 : vector<8x8xf32> to vector<8x8xbf16>
    %cst_86 = arith.constant dense<0.000000e+00> : vector<8x8xf32>
    %204 = tpu.matmul %202, %203, %cst_86 {dimension_numbers = #tpu.dot_dimension_numbers<[1], [1], [0], [0], [0, 0, 1, 0], [], []>} : vector<8x8xbf16>, vector<8x8xbf16>, vector<8x8xf32> -> vector<8x8xf32>
    %cst_87 = arith.constant dense<0xFF800000> : vector<8xf32>
    %205 = vector.multi_reduction <maximumf>, %204, %cst_87 [1] : vector<8x8xf32> to vector<8xf32>
    %206 = vector.shape_cast %205 : vector<8xf32> to vector<8x1xf32>
    %207 = vector.broadcast %206 : vector<8x1xf32> to vector<8x8xf32>
    %208 = arith.subf %204, %207 : vector<8x8xf32>
    %209 = math.exp %208 : vector<8x8xf32>
    %cst_88 = arith.constant dense<0.000000e+00> : vector<8xf32>
    %210 = vector.multi_reduction <add>, %209, %cst_88 [1] : vector<8x8xf32> to vector<8xf32>
    %211 = vector.shape_cast %210 : vector<8xf32> to vector<8x1xf32>
    %212 = tpu.reciprocal %211 {approx = true} : vector<8x1xf32> -> vector<8x1xf32>
    %213 = vector.broadcast %212 : vector<8x1xf32> to vector<8x8xf32>
    %214 = arith.mulf %209, %213 : vector<8x8xf32>
    %215 = arith.truncf %214 : vector<8x8xf32> to vector<8x8xbf16>
    %216 = arith.truncf %201 : vector<8x8xf32> to vector<8x8xbf16>
    %cst_89 = arith.constant dense<0.000000e+00> : vector<8x8xf32>
    %217 = tpu.matmul %215, %216, %cst_89 {dimension_numbers = #tpu.dot_dimension_numbers<[1], [0], [0], [1], [0, 0, 1, 1], [], []>} : vector<8x8xbf16>, vector<8x8xbf16>, vector<8x8xf32> -> vector<8x8xf32>
    %218 = vector.extract_strided_slice %196 {offsets = [0, 8], sizes = [8, 8], strides = [1, 1]} : vector<8x96xf32> to vector<8x8xf32>
    %cst_90 = arith.constant 0.353553385 : f32
    %219 = vector.broadcast %cst_90 : f32 to vector<8x8xf32>
    %220 = arith.mulf %218, %219 : vector<8x8xf32>
    %221 = vector.extract_strided_slice %196 {offsets = [0, 40], sizes = [8, 8], strides = [1, 1]} : vector<8x96xf32> to vector<8x8xf32>
    %222 = vector.extract_strided_slice %196 {offsets = [0, 72], sizes = [8, 8], strides = [1, 1]} : vector<8x96xf32> to vector<8x8xf32>
    %223 = arith.truncf %220 : vector<8x8xf32> to vector<8x8xbf16>
    %224 = arith.truncf %221 : vector<8x8xf32> to vector<8x8xbf16>
    %cst_91 = arith.constant dense<0.000000e+00> : vector<8x8xf32>
    %225 = tpu.matmul %223, %224, %cst_91 {dimension_numbers = #tpu.dot_dimension_numbers<[1], [1], [0], [0], [0, 0, 1, 0], [], []>} : vector<8x8xbf16>, vector<8x8xbf16>, vector<8x8xf32> -> vector<8x8xf32>
    %cst_92 = arith.constant dense<0xFF800000> : vector<8xf32>
    %226 = vector.multi_reduction <maximumf>, %225, %cst_92 [1] : vector<8x8xf32> to vector<8xf32>
    %227 = vector.shape_cast %226 : vector<8xf32> to vector<8x1xf32>
    %228 = vector.broadcast %227 : vector<8x1xf32> to vector<8x8xf32>
    %229 = arith.subf %225, %228 : vector<8x8xf32>
    %230 = math.exp %229 : vector<8x8xf32>
    %cst_93 = arith.constant dense<0.000000e+00> : vector<8xf32>
    %231 = vector.multi_reduction <add>, %230, %cst_93 [1] : vector<8x8xf32> to vector<8xf32>
    %232 = vector.shape_cast %231 : vector<8xf32> to vector<8x1xf32>
    %233 = tpu.reciprocal %232 {approx = true} : vector<8x1xf32> -> vector<8x1xf32>
    %234 = vector.broadcast %233 : vector<8x1xf32> to vector<8x8xf32>
    %235 = arith.mulf %230, %234 : vector<8x8xf32>
    %236 = arith.truncf %235 : vector<8x8xf32> to vector<8x8xbf16>
    %237 = arith.truncf %222 : vector<8x8xf32> to vector<8x8xbf16>
    %cst_94 = arith.constant dense<0.000000e+00> : vector<8x8xf32>
    %238 = tpu.matmul %236, %237, %cst_94 {dimension_numbers = #tpu.dot_dimension_numbers<[1], [0], [0], [1], [0, 0, 1, 1], [], []>} : vector<8x8xbf16>, vector<8x8xbf16>, vector<8x8xf32> -> vector<8x8xf32>
    %239 = vector.extract_strided_slice %196 {offsets = [0, 16], sizes = [8, 8], strides = [1, 1]} : vector<8x96xf32> to vector<8x8xf32>
    %cst_95 = arith.constant 0.353553385 : f32
    %240 = vector.broadcast %cst_95 : f32 to vector<8x8xf32>
    %241 = arith.mulf %239, %240 : vector<8x8xf32>
    %242 = vector.extract_strided_slice %196 {offsets = [0, 48], sizes = [8, 8], strides = [1, 1]} : vector<8x96xf32> to vector<8x8xf32>
    %243 = vector.extract_strided_slice %196 {offsets = [0, 80], sizes = [8, 8], strides = [1, 1]} : vector<8x96xf32> to vector<8x8xf32>
    %244 = arith.truncf %241 : vector<8x8xf32> to vector<8x8xbf16>
    %245 = arith.truncf %242 : vector<8x8xf32> to vector<8x8xbf16>
    %cst_96 = arith.constant dense<0.000000e+00> : vector<8x8xf32>
    %246 = tpu.matmul %244, %245, %cst_96 {dimension_numbers = #tpu.dot_dimension_numbers<[1], [1], [0], [0], [0, 0, 1, 0], [], []>} : vector<8x8xbf16>, vector<8x8xbf16>, vector<8x8xf32> -> vector<8x8xf32>
    %cst_97 = arith.constant dense<0xFF800000> : vector<8xf32>
    %247 = vector.multi_reduction <maximumf>, %246, %cst_97 [1] : vector<8x8xf32> to vector<8xf32>
    %248 = vector.shape_cast %247 : vector<8xf32> to vector<8x1xf32>
    %249 = vector.broadcast %248 : vector<8x1xf32> to vector<8x8xf32>
    %250 = arith.subf %246, %249 : vector<8x8xf32>
    %251 = math.exp %250 : vector<8x8xf32>
    %cst_98 = arith.constant dense<0.000000e+00> : vector<8xf32>
    %252 = vector.multi_reduction <add>, %251, %cst_98 [1] : vector<8x8xf32> to vector<8xf32>
    %253 = vector.shape_cast %252 : vector<8xf32> to vector<8x1xf32>
    %254 = tpu.reciprocal %253 {approx = true} : vector<8x1xf32> -> vector<8x1xf32>
    %255 = vector.broadcast %254 : vector<8x1xf32> to vector<8x8xf32>
    %256 = arith.mulf %251, %255 : vector<8x8xf32>
    %257 = arith.truncf %256 : vector<8x8xf32> to vector<8x8xbf16>
    %258 = arith.truncf %243 : vector<8x8xf32> to vector<8x8xbf16>
    %cst_99 = arith.constant dense<0.000000e+00> : vector<8x8xf32>
    %259 = tpu.matmul %257, %258, %cst_99 {dimension_numbers = #tpu.dot_dimension_numbers<[1], [0], [0], [1], [0, 0, 1, 1], [], []>} : vector<8x8xbf16>, vector<8x8xbf16>, vector<8x8xf32> -> vector<8x8xf32>
    %260 = vector.extract_strided_slice %196 {offsets = [0, 24], sizes = [8, 8], strides = [1, 1]} : vector<8x96xf32> to vector<8x8xf32>
    %cst_100 = arith.constant 0.353553385 : f32
    %261 = vector.broadcast %cst_100 : f32 to vector<8x8xf32>
    %262 = arith.mulf %260, %261 : vector<8x8xf32>
    %263 = vector.extract_strided_slice %196 {offsets = [0, 56], sizes = [8, 8], strides = [1, 1]} : vector<8x96xf32> to vector<8x8xf32>
    %264 = vector.extract_strided_slice %196 {offsets = [0, 88], sizes = [8, 8], strides = [1, 1]} : vector<8x96xf32> to vector<8x8xf32>
    %265 = arith.truncf %262 : vector<8x8xf32> to vector<8x8xbf16>
    %266 = arith.truncf %263 : vector<8x8xf32> to vector<8x8xbf16>
    %cst_101 = arith.constant dense<0.000000e+00> : vector<8x8xf32>
    %267 = tpu.matmul %265, %266, %cst_101 {dimension_numbers = #tpu.dot_dimension_numbers<[1], [1], [0], [0], [0, 0, 1, 0], [], []>} : vector<8x8xbf16>, vector<8x8xbf16>, vector<8x8xf32> -> vector<8x8xf32>
    %cst_102 = arith.constant dense<0xFF800000> : vector<8xf32>
    %268 = vector.multi_reduction <maximumf>, %267, %cst_102 [1] : vector<8x8xf32> to vector<8xf32>
    %269 = vector.shape_cast %268 : vector<8xf32> to vector<8x1xf32>
    %270 = vector.broadcast %269 : vector<8x1xf32> to vector<8x8xf32>
    %271 = arith.subf %267, %270 : vector<8x8xf32>
    %272 = math.exp %271 : vector<8x8xf32>
    %cst_103 = arith.constant dense<0.000000e+00> : vector<8xf32>
    %273 = vector.multi_reduction <add>, %272, %cst_103 [1] : vector<8x8xf32> to vector<8xf32>
    %274 = vector.shape_cast %273 : vector<8xf32> to vector<8x1xf32>
    %275 = tpu.reciprocal %274 {approx = true} : vector<8x1xf32> -> vector<8x1xf32>
    %276 = vector.broadcast %275 : vector<8x1xf32> to vector<8x8xf32>
    %277 = arith.mulf %272, %276 : vector<8x8xf32>
    %278 = arith.truncf %277 : vector<8x8xf32> to vector<8x8xbf16>
    %279 = arith.truncf %264 : vector<8x8xf32> to vector<8x8xbf16>
    %cst_104 = arith.constant dense<0.000000e+00> : vector<8x8xf32>
    %280 = tpu.matmul %278, %279, %cst_104 {dimension_numbers = #tpu.dot_dimension_numbers<[1], [0], [0], [1], [0, 0, 1, 1], [], []>} : vector<8x8xbf16>, vector<8x8xbf16>, vector<8x8xf32> -> vector<8x8xf32>
    %281 = tpu.concatenate %217, %238, %259, %280 in 1 : vector<8x8xf32>, vector<8x8xf32>, vector<8x8xf32>, vector<8x8xf32> -> vector<8x32xf32>
    %c1_105 = arith.constant 1 : index
    %c0_106 = arith.constant 0 : index
    %c0_107 = arith.constant 0 : index
    %282 = vector.load %arg7[%c1_105, %c0_106, %c0_107] : memref<2x32x32xf32, #tpu.memory_space<vmem>>, vector<1x32x32xf32>
    %283 = vector.shape_cast %282 : vector<1x32x32xf32> to vector<32x32xf32>
    %284 = arith.truncf %281 : vector<8x32xf32> to vector<8x32xbf16>
    %285 = arith.truncf %283 : vector<32x32xf32> to vector<32x32xbf16>
    %cst_108 = arith.constant dense<0.000000e+00> : vector<8x32xf32>
    %286 = tpu.matmul %284, %285, %cst_108 {dimension_numbers = #tpu.dot_dimension_numbers<[1], [1], [0], [0], [0, 0, 1, 0], [], []>} : vector<8x32xbf16>, vector<32x32xbf16>, vector<8x32xf32> -> vector<8x32xf32>
    %c1_109 = arith.constant 1 : index
    %c0_110 = arith.constant 0 : index
    %c0_111 = arith.constant 0 : index
    %287 = vector.load %arg8[%c1_109, %c0_110, %c0_111] : memref<2x1x32xf32, #tpu.memory_space<vmem>>, vector<1x1x32xf32>
    %288 = vector.shape_cast %287 : vector<1x1x32xf32> to vector<1x32xf32>
    %289 = vector.broadcast %288 : vector<1x32xf32> to vector<8x32xf32>
    %290 = arith.addf %286, %289 : vector<8x32xf32>
    %291 = arith.addf %187, %290 : vector<8x32xf32>
    %c1_112 = arith.constant 1 : index
    %c0_113 = arith.constant 0 : index
    %c0_114 = arith.constant 0 : index
    %292 = vector.load %arg9[%c1_112, %c0_113, %c0_114] : memref<2x1x32xf32, #tpu.memory_space<vmem>>, vector<1x1x32xf32>
    %293 = vector.shape_cast %292 : vector<1x1x32xf32> to vector<1x32xf32>
    %c1_115 = arith.constant 1 : index
    %c0_116 = arith.constant 0 : index
    %c0_117 = arith.constant 0 : index
    %294 = vector.load %arg10[%c1_115, %c0_116, %c0_117] : memref<2x1x32xf32, #tpu.memory_space<vmem>>, vector<1x1x32xf32>
    %295 = vector.shape_cast %294 : vector<1x1x32xf32> to vector<1x32xf32>
    %cst_118 = arith.constant dense<0.000000e+00> : vector<8xf32>
    %296 = vector.multi_reduction <add>, %291, %cst_118 [1] : vector<8x32xf32> to vector<8xf32>
    %297 = vector.shape_cast %296 : vector<8xf32> to vector<8x1xf32>
    %cst_119 = arith.constant 3.200000e+01 : f32
    %298 = vector.broadcast %cst_119 : f32 to vector<8x1xf32>
    %299 = arith.divf %297, %298 : vector<8x1xf32>
    %300 = vector.broadcast %299 : vector<8x1xf32> to vector<8x32xf32>
    %301 = arith.subf %291, %300 : vector<8x32xf32>
    %302 = arith.mulf %301, %301 : vector<8x32xf32>
    %cst_120 = arith.constant dense<0.000000e+00> : vector<8xf32>
    %303 = vector.multi_reduction <add>, %302, %cst_120 [1] : vector<8x32xf32> to vector<8xf32>
    %304 = vector.shape_cast %303 : vector<8xf32> to vector<8x1xf32>
    %cst_121 = arith.constant 3.200000e+01 : f32
    %305 = vector.broadcast %cst_121 : f32 to vector<8x1xf32>
    %306 = arith.divf %304, %305 : vector<8x1xf32>
    %307 = vector.broadcast %299 : vector<8x1xf32> to vector<8x32xf32>
    %308 = arith.subf %291, %307 : vector<8x32xf32>
    %cst_122 = arith.constant 9.99999974E-6 : f32
    %309 = vector.broadcast %cst_122 : f32 to vector<8x1xf32>
    %310 = arith.addf %306, %309 : vector<8x1xf32>
    %311 = math.rsqrt %310 : vector<8x1xf32>
    %312 = vector.broadcast %311 : vector<8x1xf32> to vector<8x32xf32>
    %313 = arith.mulf %308, %312 : vector<8x32xf32>
    %314 = vector.broadcast %293 : vector<1x32xf32> to vector<8x32xf32>
    %315 = arith.mulf %313, %314 : vector<8x32xf32>
    %316 = vector.broadcast %295 : vector<1x32xf32> to vector<8x32xf32>
    %317 = arith.addf %315, %316 : vector<8x32xf32>
    %c1_123 = arith.constant 1 : index
    %c0_124 = arith.constant 0 : index
    %c0_125 = arith.constant 0 : index
    %318 = vector.load %arg11[%c1_123, %c0_124, %c0_125] : memref<2x64x32xf32, #tpu.memory_space<vmem>>, vector<1x64x32xf32>
    %319 = vector.shape_cast %318 : vector<1x64x32xf32> to vector<64x32xf32>
    %320 = arith.truncf %317 : vector<8x32xf32> to vector<8x32xbf16>
    %321 = arith.truncf %319 : vector<64x32xf32> to vector<64x32xbf16>
    %cst_126 = arith.constant dense<0.000000e+00> : vector<8x64xf32>
    %322 = tpu.matmul %320, %321, %cst_126 {dimension_numbers = #tpu.dot_dimension_numbers<[1], [1], [0], [0], [0, 0, 1, 0], [], []>} : vector<8x32xbf16>, vector<64x32xbf16>, vector<8x64xf32> -> vector<8x64xf32>
    %c1_127 = arith.constant 1 : index
    %c0_128 = arith.constant 0 : index
    %c0_129 = arith.constant 0 : index
    %323 = vector.load %arg12[%c1_127, %c0_128, %c0_129] : memref<2x1x64xf32, #tpu.memory_space<vmem>>, vector<1x1x64xf32>
    %324 = vector.shape_cast %323 : vector<1x1x64xf32> to vector<1x64xf32>
    %325 = vector.broadcast %324 : vector<1x64xf32> to vector<8x64xf32>
    %326 = arith.addf %322, %325 : vector<8x64xf32>
    %cst_130 = arith.constant 0.000000e+00 : f32
    %327 = vector.broadcast %cst_130 : f32 to vector<8x64xf32>
    %328 = arith.maximumf %326, %327 : vector<8x64xf32>
    %c1_131 = arith.constant 1 : index
    %c0_132 = arith.constant 0 : index
    %c0_133 = arith.constant 0 : index
    %329 = vector.load %arg13[%c1_131, %c0_132, %c0_133] : memref<2x32x64xf32, #tpu.memory_space<vmem>>, vector<1x32x64xf32>
    %330 = vector.shape_cast %329 : vector<1x32x64xf32> to vector<32x64xf32>
    %331 = arith.truncf %328 : vector<8x64xf32> to vector<8x64xbf16>
    %332 = arith.truncf %330 : vector<32x64xf32> to vector<32x64xbf16>
    %cst_134 = arith.constant dense<0.000000e+00> : vector<8x32xf32>
    %333 = tpu.matmul %331, %332, %cst_134 {dimension_numbers = #tpu.dot_dimension_numbers<[1], [1], [0], [0], [0, 0, 1, 0], [], []>} : vector<8x64xbf16>, vector<32x64xbf16>, vector<8x32xf32> -> vector<8x32xf32>
    %c1_135 = arith.constant 1 : index
    %c0_136 = arith.constant 0 : index
    %c0_137 = arith.constant 0 : index
    %334 = vector.load %arg14[%c1_135, %c0_136, %c0_137] : memref<2x1x32xf32, #tpu.memory_space<vmem>>, vector<1x1x32xf32>
    %335 = vector.shape_cast %334 : vector<1x1x32xf32> to vector<1x32xf32>
    %336 = vector.broadcast %335 : vector<1x32xf32> to vector<8x32xf32>
    %337 = arith.addf %333, %336 : vector<8x32xf32>
    %338 = arith.addf %317, %337 : vector<8x32xf32>
    %c1_138 = arith.constant 1 : index
    %c0_139 = arith.constant 0 : index
    %c0_140 = arith.constant 0 : index
    %339 = vector.load %arg15[%c1_138, %c0_139, %c0_140] : memref<2x1x32xf32, #tpu.memory_space<vmem>>, vector<1x1x32xf32>
    %340 = vector.shape_cast %339 : vector<1x1x32xf32> to vector<1x32xf32>
    %c1_141 = arith.constant 1 : index
    %c0_142 = arith.constant 0 : index
    %c0_143 = arith.constant 0 : index
    %341 = vector.load %arg16[%c1_141, %c0_142, %c0_143] : memref<2x1x32xf32, #tpu.memory_space<vmem>>, vector<1x1x32xf32>
    %342 = vector.shape_cast %341 : vector<1x1x32xf32> to vector<1x32xf32>
    %cst_144 = arith.constant dense<0.000000e+00> : vector<8xf32>
    %343 = vector.multi_reduction <add>, %338, %cst_144 [1] : vector<8x32xf32> to vector<8xf32>
    %344 = vector.shape_cast %343 : vector<8xf32> to vector<8x1xf32>
    %cst_145 = arith.constant 3.200000e+01 : f32
    %345 = vector.broadcast %cst_145 : f32 to vector<8x1xf32>
    %346 = arith.divf %344, %345 : vector<8x1xf32>
    %347 = vector.broadcast %346 : vector<8x1xf32> to vector<8x32xf32>
    %348 = arith.subf %338, %347 : vector<8x32xf32>
    %349 = arith.mulf %348, %348 : vector<8x32xf32>
    %cst_146 = arith.constant dense<0.000000e+00> : vector<8xf32>
    %350 = vector.multi_reduction <add>, %349, %cst_146 [1] : vector<8x32xf32> to vector<8xf32>
    %351 = vector.shape_cast %350 : vector<8xf32> to vector<8x1xf32>
    %cst_147 = arith.constant 3.200000e+01 : f32
    %352 = vector.broadcast %cst_147 : f32 to vector<8x1xf32>
    %353 = arith.divf %351, %352 : vector<8x1xf32>
    %354 = vector.broadcast %346 : vector<8x1xf32> to vector<8x32xf32>
    %355 = arith.subf %338, %354 : vector<8x32xf32>
    %cst_148 = arith.constant 9.99999974E-6 : f32
    %356 = vector.broadcast %cst_148 : f32 to vector<8x1xf32>
    %357 = arith.addf %353, %356 : vector<8x1xf32>
    %358 = math.rsqrt %357 : vector<8x1xf32>
    %359 = vector.broadcast %358 : vector<8x1xf32> to vector<8x32xf32>
    %360 = arith.mulf %355, %359 : vector<8x32xf32>
    %361 = vector.broadcast %340 : vector<1x32xf32> to vector<8x32xf32>
    %362 = arith.mulf %360, %361 : vector<8x32xf32>
    %363 = vector.broadcast %342 : vector<1x32xf32> to vector<8x32xf32>
    %364 = arith.addf %362, %363 : vector<8x32xf32>
    %c0_149 = arith.constant 0 : index
    %c0_150 = arith.constant 0 : index
    %365 = vector.load %arg17[%c0_149, %c0_150] : memref<4x32xf32, #tpu.memory_space<vmem>>, vector<4x32xf32>
    %366 = arith.truncf %364 : vector<8x32xf32> to vector<8x32xbf16>
    %367 = arith.truncf %365 : vector<4x32xf32> to vector<4x32xbf16>
    %cst_151 = arith.constant dense<0.000000e+00> : vector<8x4xf32>
    %368 = tpu.matmul %366, %367, %cst_151 {dimension_numbers = #tpu.dot_dimension_numbers<[1], [1], [0], [0], [0, 0, 1, 0], [], []>} : vector<8x32xbf16>, vector<4x32xbf16>, vector<8x4xf32> -> vector<8x4xf32>
    %c0_152 = arith.constant 0 : index
    %c0_153 = arith.constant 0 : index
    %369 = vector.load %arg18[%c0_152, %c0_153] : memref<1x4xf32, #tpu.memory_space<vmem>>, vector<1x4xf32>
    %370 = vector.broadcast %369 : vector<1x4xf32> to vector<8x4xf32>
    %371 = arith.addf %368, %370 : vector<8x4xf32>
    %c0_154 = arith.constant 0 : index
    %c0_155 = arith.constant 0 : index
    %c0_156 = arith.constant 0 : index
    %372 = vector.load %arg19[%c0_154, %c0_155, %c0_156] : memref<1x8x4xf32, #tpu.memory_space<vmem>>, vector<1x8x4xf32>
    %373 = vector.shape_cast %372 : vector<1x8x4xf32> to vector<8x4xf32>
    %374 = vector.shape_cast %371 : vector<8x4xf32> to vector<1x8x4xf32>
    tpu.vector_store %arg19[%c0_154, %c0_155, %c0_156], %374 {strides = array<i32>} : memref<1x8x4xf32, #tpu.memory_space<vmem>>, vector<1x8x4xf32>,
    return
  }
  func.func @transform_0(%arg0: i32) -> (i32, i32, i32) {
    %c0_i32 = arith.constant 0 : i32
    %c0_i32_0 = arith.constant 0 : i32
    %c0_i32_1 = arith.constant 0 : i32
    return %arg0, %c0_i32, %c0_i32_0 : i32, i32, i32
  }
  func.func @transform_1(%arg0: i32) -> (i32, i32) {
    %c0_i32 = arith.constant 0 : i32
    %c0_i32_0 = arith.constant 0 : i32
    %c0_i32_1 = arith.constant 0 : i32
    return %c0_i32, %c0_i32_0 : i32, i32
  }
  func.func @transform_2(%arg0: i32) -> (i32, i32) {
    %c0_i32 = arith.constant 0 : i32
    %c0_i32_0 = arith.constant 0 : i32
    %c0_i32_1 = arith.constant 0 : i32
    return %c0_i32, %c0_i32_0 : i32, i32
  }
  func.func @transform_3(%arg0: i32) -> (i32, i32) {
    %c0_i32 = arith.constant 0 : i32
    %c0_i32_0 = arith.constant 0 : i32
    %c0_i32_1 = arith.constant 0 : i32
    return %c0_i32, %c0_i32_0 : i32, i32
  }
  func.func @transform_4(%arg0: i32) -> (i32, i32, i32) {
    %c0_i32 = arith.constant 0 : i32
    %c0_i32_0 = arith.constant 0 : i32
    %c0_i32_1 = arith.constant 0 : i32
    %c0_i32_2 = arith.constant 0 : i32
    return %c0_i32, %c0_i32_0, %c0_i32_1 : i32, i32, i32
  }
  func.func @transform_5(%arg0: i32) -> (i32, i32, i32) {
    %c0_i32 = arith.constant 0 : i32
    %c0_i32_0 = arith.constant 0 : i32
    %c0_i32_1 = arith.constant 0 : i32
    %c0_i32_2 = arith.constant 0 : i32
    return %c0_i32, %c0_i32_0, %c0_i32_1 : i32, i32, i32
  }
  func.func @transform_6(%arg0: i32) -> (i32, i32, i32) {
    %c0_i32 = arith.constant 0 : i32
    %c0_i32_0 = arith.constant 0 : i32
    %c0_i32_1 = arith.constant 0 : i32
    %c0_i32_2 = arith.constant 0 : i32
    return %c0_i32, %c0_i32_0, %c0_i32_1 : i32, i32, i32
  }
  func.func @transform_7(%arg0: i32) -> (i32, i32, i32) {
    %c0_i32 = arith.constant 0 : i32
    %c0_i32_0 = arith.constant 0 : i32
    %c0_i32_1 = arith.constant 0 : i32
    %c0_i32_2 = arith.constant 0 : i32
    return %c0_i32, %c0_i32_0, %c0_i32_1 : i32, i32, i32
  }
  func.func @transform_8(%arg0: i32) -> (i32, i32, i32) {
    %c0_i32 = arith.constant 0 : i32
    %c0_i32_0 = arith.constant 0 : i32
    %c0_i32_1 = arith.constant 0 : i32
    %c0_i32_2 = arith.constant 0 : i32
    return %c0_i32, %c0_i32_0, %c0_i32_1 : i32, i32, i32
  }
  func.func @transform_9(%arg0: i32) -> (i32, i32, i32) {
    %c0_i32 = arith.constant 0 : i32
    %c0_i32_0 = arith.constant 0 : i32
    %c0_i32_1 = arith.constant 0 : i32
    %c0_i32_2 = arith.constant 0 : i32
    return %c0_i32, %c0_i32_0, %c0_i32_1 : i32, i32, i32
  }
  func.func @transform_10(%arg0: i32) -> (i32, i32, i32) {
    %c0_i32 = arith.constant 0 : i32
    %c0_i32_0 = arith.constant 0 : i32
    %c0_i32_1 = arith.constant 0 : i32
    %c0_i32_2 = arith.constant 0 : i32
    return %c0_i32, %c0_i32_0, %c0_i32_1 : i32, i32, i32
  }
  func.func @transform_11(%arg0: i32) -> (i32, i32, i32) {
    %c0_i32 = arith.constant 0 : i32
    %c0_i32_0 = arith.constant 0 : i32
    %c0_i32_1 = arith.constant 0 : i32
    %c0_i32_2 = arith.constant 0 : i32
    return %c0_i32, %c0_i32_0, %c0_i32_1 : i32, i32, i32
  }
  func.func @transform_12(%arg0: i32) -> (i32, i32, i32) {
    %c0_i32 = arith.constant 0 : i32
    %c0_i32_0 = arith.constant 0 : i32
    %c0_i32_1 = arith.constant 0 : i32
    %c0_i32_2 = arith.constant 0 : i32
    return %c0_i32, %c0_i32_0, %c0_i32_1 : i32, i32, i32
  }
  func.func @transform_13(%arg0: i32) -> (i32, i32, i32) {
    %c0_i32 = arith.constant 0 : i32
    %c0_i32_0 = arith.constant 0 : i32
    %c0_i32_1 = arith.constant 0 : i32
    %c0_i32_2 = arith.constant 0 : i32
    return %c0_i32, %c0_i32_0, %c0_i32_1 : i32, i32, i32
  }
  func.func @transform_14(%arg0: i32) -> (i32, i32, i32) {
    %c0_i32 = arith.constant 0 : i32
    %c0_i32_0 = arith.constant 0 : i32
    %c0_i32_1 = arith.constant 0 : i32
    %c0_i32_2 = arith.constant 0 : i32
    return %c0_i32, %c0_i32_0, %c0_i32_1 : i32, i32, i32
  }
  func.func @transform_15(%arg0: i32) -> (i32, i32, i32) {
    %c0_i32 = arith.constant 0 : i32
    %c0_i32_0 = arith.constant 0 : i32
    %c0_i32_1 = arith.constant 0 : i32
    %c0_i32_2 = arith.constant 0 : i32
    return %c0_i32, %c0_i32_0, %c0_i32_1 : i32, i32, i32
  }
  func.func @transform_16(%arg0: i32) -> (i32, i32) {
    %c0_i32 = arith.constant 0 : i32
    %c0_i32_0 = arith.constant 0 : i32
    %c0_i32_1 = arith.constant 0 : i32
    return %c0_i32, %c0_i32_0 : i32, i32
  }
  func.func @transform_17(%arg0: i32) -> (i32, i32) {
    %c0_i32 = arith.constant 0 : i32
    %c0_i32_0 = arith.constant 0 : i32
    %c0_i32_1 = arith.constant 0 : i32
    return %c0_i32, %c0_i32_0 : i32, i32
  }
  func.func @transform_18(%arg0: i32) -> (i32, i32, i32) {
    %c0_i32 = arith.constant 0 : i32
    %c0_i32_0 = arith.constant 0 : i32
    %c0_i32_1 = arith.constant 0 : i32
    return %arg0, %c0_i32, %c0_i32_0 : i32, i32, i32
  }
}

</mosaic_0001>

<llo_original>
// kernel: market_transformer_forward.1
$region0: #{market_transformer_forward.1}
  #allocation0 [shape = 'u32[]', space=smem, size = 0x4, offset = 0x4, fixed_abs, tag = 'smem constant byte address 0x4 - core index']
  #allocation1 [shape = 'u32[72,128]{1,0:T(1,128)}', space=vmem, size = 0x9000, scoped, tag = 'internal scratch']
  %s0 = inlined_call_operand.vmem [shape: f32[2,8,16], index: 0, kind: input, shape index: {}]
  %s1 = inlined_call_operand.vmem [shape: f32[8,32], index: 1, kind: input, shape index: {}]
  %s2 = inlined_call_operand.vmem [shape: f32[32,16], index: 2, kind: input, shape index: {}]
  %s3 = inlined_call_operand.vmem [shape: f32[1,32], index: 3, kind: input, shape index: {}]
  %s4 = inlined_call_operand.vmem [shape: f32[2,96,32], index: 4, kind: input, shape index: {}]
  %s5 = inlined_call_operand.vmem [shape: f32[2,1,96], index: 5, kind: input, shape index: {}]
  %s6 = inlined_call_operand.vmem [shape: f32[2,32,32], index: 6, kind: input, shape index: {}]
  %s7 = inlined_call_operand.vmem [shape: f32[2,1,32], index: 7, kind: input, shape index: {}]
  %s8 = inlined_call_operand.vmem [shape: f32[2,1,32], index: 8, kind: input, shape index: {}]
  %s9 = inlined_call_operand.vmem [shape: f32[2,1,32], index: 9, kind: input, shape index: {}]
  %s10 = inlined_call_operand.vmem [shape: f32[2,64,32], index: 10, kind: input, shape index: {}]
  %s11 = inlined_call_operand.vmem [shape: f32[2,1,64], index: 11, kind: input, shape index: {}]
  %s12 = inlined_call_operand.vmem [shape: f32[2,32,64], index: 12, kind: input, shape index: {}]
  %s13 = inlined_call_operand.vmem [shape: f32[2,1,32], index: 13, kind: input, shape index: {}]
  %s14 = inlined_call_operand.vmem [shape: f32[2,1,32], index: 14, kind: input, shape index: {}]
  %s15 = inlined_call_operand.vmem [shape: f32[2,1,32], index: 15, kind: input, shape index: {}]
  %s16 = inlined_call_operand.vmem [shape: f32[4,32], index: 16, kind: input, shape index: {}]
  %s17 = inlined_call_operand.vmem [shape: f32[1,4], index: 17, kind: input, shape index: {}]
  %s18 = inlined_call_operand.vmem [shape: f32[2,8,4], index: 18, kind: output, shape index: {}]
  %s19 = sld [smem:[#allocation0]]
  $region105: #{market_transformer_forward.1} parent=0
    _
  %s21 = ssub.s32 1, %s19
  %s22 = scalar_select 0, %s21, %s19
  loop: start=0, step=1, limit=4
  $region2: #{market_transformer_forward.1} parent=0 // loop_pre_header
    _
  $region3: #{market_transformer_forward.1} parent=0 // loop_header
    %s24 = sphi 0, %s28
    %p25 = scmp.ge.s32.totalorder %s24, 4
    %s34 = sphi 0, %s36
    %s37 = sphi 0, %s34
    %s38 = sphi 0, %s37
    %s54 = sphi 0, %s38
    %s58 = sphi 0, %s58
    %s60 = sphi 0, %s58
    %s61 = sphi 0, %s60
    %s75 = sphi 0, %s61
    %s79 = sphi 0, %s79
    %s81 = sphi 0, %s79
    %s82 = sphi 0, %s81
    %s96 = sphi 0, %s82
    %s100 = sphi 0, %s100
    %s102 = sphi 0, %s100
    %s103 = sphi 0, %s102
    %s117 = sphi 0, %s103
    %s121 = sphi 0, %s121
    %s123 = sphi 0, %s121
    %s124 = sphi 0, %s123
    %s138 = sphi 0, %s124
    %s142 = sphi 0, %s142
    %s144 = sphi 0, %s142
    %s145 = sphi 0, %s144
    %s159 = sphi 0, %s145
    %s163 = sphi 0, %s163
    %s165 = sphi 0, %s163
    %s166 = sphi 0, %s165
    %s180 = sphi 0, %s166
    %s184 = sphi 0, %s184
    %s186 = sphi 0, %s184
    %s187 = sphi 0, %s186
    %s201 = sphi 0, %s187
    %s205 = sphi 0, %s205
    %s207 = sphi 0, %s205
    %s208 = sphi 0, %s207
    %s222 = sphi 0, %s208
    %s226 = sphi 0, %s226
    %s228 = sphi 0, %s226
    %s229 = sphi 0, %s228
    %s243 = sphi 0, %s229
    %s247 = sphi 0, %s247
    %s249 = sphi 0, %s247
    %s250 = sphi 0, %s249
    %s264 = sphi 0, %s250
    %s268 = sphi 0, %s268
    %s270 = sphi 0, %s268
    %s271 = sphi 0, %s270
    %s285 = sphi 0, %s271
    %s289 = sphi 0, %s289
    %s291 = sphi 0, %s289
    %s292 = sphi 0, %s291
    %s306 = sphi 0, %s292
    %s310 = sphi 0, %s310
    %s312 = sphi 0, %s310
    %s313 = sphi 0, %s312
    %s327 = sphi 0, %s313
    %s331 = sphi 0, %s331
    %s333 = sphi 0, %s331
    %s334 = sphi 0, %s333
    %s348 = sphi 0, %s334
    %s352 = sphi 0, %s352
    %s354 = sphi 0, %s352
    %s355 = sphi 0, %s354
    %s369 = sphi 0, %s355
    %s373 = sphi 0, %s373
    %s375 = sphi 0, %s373
    %s376 = sphi 0, %s375
    %s390 = sphi 0, %s376
    %s394 = sphi 0, %s394
    %s396 = sphi 0, %s394
    %s397 = sphi 0, %s396
    %s411 = sphi 0, %s397
    %s417 = sphi 0, %s419
    %s420 = sphi 0, %s417
    %s421 = sphi 0, %s420
    %s437 = sphi 0, %s421
  $region4: #{market_transformer_forward.1} parent=0 // loop_header_branch
    %27 = sbr.rel (%p25) target = $region8
  $region5: #{market_transformer_forward.1} parent=0 // loop_body
    %s29 = ssub.s32 %s24, 1
    %s30 = ssub.s32 %s24, 2
    %s31 = sadd.s32 %s24, 1
    %s32 = ssub.s32 %s24, %s31
    %p33 = scmp.eq.s32.totalorder %s32, 0
    %s35 = sadd.s32 %s34, 1
    %s36 = scalar_select %p33, %s34, %s35
    %p39 = pneg %p33
    %p40 = scmp.eq.s32.totalorder %s24, 1
    %p41 = por %p39, %p40
    %p42 = scmp.ne.s32.totalorder %s34, %s37
    %p43 = scmp.eq.s32.totalorder %s24, 0
    %p44 = por %p42, %p43
    %p45 = scmp.ne.s32.totalorder %s34, %s37
    %p46 = scmp.eq.s32.totalorder %s29, 1
    %p47 = por %p45, %p46
    %p48 = scmp.ne.s32.totalorder %s37, %s38
    %p49 = scmp.eq.s32.totalorder %s29, 0
    %p50 = por %p48, %p49
    %p51 = scmp.ne.s32.totalorder %s37, %s38
    %p52 = scmp.eq.s32.totalorder %s30, 1
    %p53 = por %p51, %p52
    %p55 = scmp.ne.s32.totalorder %s38, %s54
    %p56 = scmp.eq.s32.totalorder %s30, 0
    %p57 = por %p55, %p56
    %s59 = sadd.s32 %s58, 1
    %p62 = scmp.eq.s32.totalorder %s24, 1
    %p63 = scmp.ne.s32.totalorder %s58, %s60
    %p64 = scmp.eq.s32.totalorder %s24, 0
    %p65 = por %p63, %p64
    %p66 = scmp.ne.s32.totalorder %s58, %s60
    %p67 = scmp.eq.s32.totalorder %s29, 1
    %p68 = por %p66, %p67
    %p69 = scmp.ne.s32.totalorder %s60, %s61
    %p70 = scmp.eq.s32.totalorder %s29, 0
    %p71 = por %p69, %p70
    %p72 = scmp.ne.s32.totalorder %s60, %s61
    %p73 = scmp.eq.s32.totalorder %s30, 1
    %p74 = por %p72, %p73
    %p76 = scmp.ne.s32.totalorder %s61, %s75
    %p77 = scmp.eq.s32.totalorder %s30, 0
    %p78 = por %p76, %p77
    %s80 = sadd.s32 %s79, 1
    %p83 = scmp.eq.s32.totalorder %s24, 1
    %p84 = scmp.ne.s32.totalorder %s79, %s81
    %p85 = scmp.eq.s32.totalorder %s24, 0
    %p86 = por %p84, %p85
    %p87 = scmp.ne.s32.totalorder %s79, %s81
    %p88 = scmp.eq.s32.totalorder %s29, 1
    %p89 = por %p87, %p88
    %p90 = scmp.ne.s32.totalorder %s81, %s82
    %p91 = scmp.eq.s32.totalorder %s29, 0
    %p92 = por %p90, %p91
    %p93 = scmp.ne.s32.totalorder %s81, %s82
    %p94 = scmp.eq.s32.totalorder %s30, 1
    %p95 = por %p93, %p94
    %p97 = scmp.ne.s32.totalorder %s82, %s96
    %p98 = scmp.eq.s32.totalorder %s30, 0
    %p99 = por %p97, %p98
    %s101 = sadd.s32 %s100, 1
    %p104 = scmp.eq.s32.totalorder %s24, 1
    %p105 = scmp.ne.s32.totalorder %s100, %s102
    %p106 = scmp.eq.s32.totalorder %s24, 0
    %p107 = por %p105, %p106
    %p108 = scmp.ne.s32.totalorder %s100, %s102
    %p109 = scmp.eq.s32.totalorder %s29, 1
    %p110 = por %p108, %p109
    %p111 = scmp.ne.s32.totalorder %s102, %s103
    %p112 = scmp.eq.s32.totalorder %s29, 0
    %p113 = por %p111, %p112
    %p114 = scmp.ne.s32.totalorder %s102, %s103
    %p115 = scmp.eq.s32.totalorder %s30, 1
    %p116 = por %p114, %p115
    %p118 = scmp.ne.s32.totalorder %s103, %s117
    %p119 = scmp.eq.s32.totalorder %s30, 0
    %p120 = por %p118, %p119
    %s122 = sadd.s32 %s121, 1
    %p125 = scmp.eq.s32.totalorder %s24, 1
    %p126 = scmp.ne.s32.totalorder %s121, %s123
    %p127 = scmp.eq.s32.totalorder %s24, 0
    %p128 = por %p126, %p127
    %p129 = scmp.ne.s32.totalorder %s121, %s123
    %p130 = scmp.eq.s32.totalorder %s29, 1
    %p131 = por %p129, %p130
    %p132 = scmp.ne.s32.totalorder %s123, %s124
    %p133 = scmp.eq.s32.totalorder %s29, 0
    %p134 = por %p132, %p133
    %p135 = scmp.ne.s32.totalorder %s123, %s124
    %p136 = scmp.eq.s32.totalorder %s30, 1
    %p137 = por %p135, %p136
    %p139 = scmp.ne.s32.totalorder %s124, %s138
    %p140 = scmp.eq.s32.totalorder %s30, 0
    %p141 = por %p139, %p140
    %s143 = sadd.s32 %s142, 1
    %p146 = scmp.eq.s32.totalorder %s24, 1
    %p147 = scmp.ne.s32.totalorder %s142, %s144
    %p148 = scmp.eq.s32.totalorder %s24, 0
    %p149 = por %p147, %p148
    %p150 = scmp.ne.s32.totalorder %s142, %s144
    %p151 = scmp.eq.s32.totalorder %s29, 1
    %p152 = por %p150, %p151
    %p153 = scmp.ne.s32.totalorder %s144, %s145
    %p154 = scmp.eq.s32.totalorder %s29, 0
    %p155 = por %p153, %p154
    %p156 = scmp.ne.s32.totalorder %s144, %s145
    %p157 = scmp.eq.s32.totalorder %s30, 1
    %p158 = por %p156, %p157
    %p160 = scmp.ne.s32.totalorder %s145, %s159
    %p161 = scmp.eq.s32.totalorder %s30, 0
    %p162 = por %p160, %p161
    %s164 = sadd.s32 %s163, 1
    %p167 = scmp.eq.s32.totalorder %s24, 1
    %p168 = scmp.ne.s32.totalorder %s163, %s165
    %p169 = scmp.eq.s32.totalorder %s24, 0
    %p170 = por %p168, %p169
    %p171 = scmp.ne.s32.totalorder %s163, %s165
    %p172 = scmp.eq.s32.totalorder %s29, 1
    %p173 = por %p171, %p172
    %p174 = scmp.ne.s32.totalorder %s165, %s166
    %p175 = scmp.eq.s32.totalorder %s29, 0
    %p176 = por %p174, %p175
    %p177 = scmp.ne.s32.totalorder %s165, %s166
    %p178 = scmp.eq.s32.totalorder %s30, 1
    %p179 = por %p177, %p178
    %p181 = scmp.ne.s32.totalorder %s166, %s180
    %p182 = scmp.eq.s32.totalorder %s30, 0
    %p183 = por %p181, %p182
    %s185 = sadd.s32 %s184, 1
    %p188 = scmp.eq.s32.totalorder %s24, 1
    %p189 = scmp.ne.s32.totalorder %s184, %s186
    %p190 = scmp.eq.s32.totalorder %s24, 0
    %p191 = por %p189, %p190
    %p192 = scmp.ne.s32.totalorder %s184, %s186
    %p193 = scmp.eq.s32.totalorder %s29, 1
    %p194 = por %p192, %p193
    %p195 = scmp.ne.s32.totalorder %s186, %s187
    %p196 = scmp.eq.s32.totalorder %s29, 0
    %p197 = por %p195, %p196
    %p198 = scmp.ne.s32.totalorder %s186, %s187
    %p199 = scmp.eq.s32.totalorder %s30, 1
    %p200 = por %p198, %p199
    %p202 = scmp.ne.s32.totalorder %s187, %s201
    %p203 = scmp.eq.s32.totalorder %s30, 0
    %p204 = por %p202, %p203
    %s206 = sadd.s32 %s205, 1
    %p209 = scmp.eq.s32.totalorder %s24, 1
    %p210 = scmp.ne.s32.totalorder %s205, %s207
    %p211 = scmp.eq.s32.totalorder %s24, 0
    %p212 = por %p210, %p211
    %p213 = scmp.ne.s32.totalorder %s205, %s207
    %p214 = scmp.eq.s32.totalorder %s29, 1
    %p215 = por %p213, %p214
    %p216 = scmp.ne.s32.totalorder %s207, %s208
    %p217 = scmp.eq.s32.totalorder %s29, 0
    %p218 = por %p216, %p217
    %p219 = scmp.ne.s32.totalorder %s207, %s208
    %p220 = scmp.eq.s32.totalorder %s30, 1
    %p221 = por %p219, %p220
    %p223 = scmp.ne.s32.totalorder %s208, %s222
    %p224 = scmp.eq.s32.totalorder %s30, 0
    %p225 = por %p223, %p224
    %s227 = sadd.s32 %s226, 1
    %p230 = scmp.eq.s32.totalorder %s24, 1
    %p231 = scmp.ne.s32.totalorder %s226, %s228
    %p232 = scmp.eq.s32.totalorder %s24, 0
    %p233 = por %p231, %p232
    %p234 = scmp.ne.s32.totalorder %s226, %s228
    %p235 = scmp.eq.s32.totalorder %s29, 1
    %p236 = por %p234, %p235
    %p237 = scmp.ne.s32.totalorder %s228, %s229
    %p238 = scmp.eq.s32.totalorder %s29, 0
    %p239 = por %p237, %p238
    %p240 = scmp.ne.s32.totalorder %s228, %s229
    %p241 = scmp.eq.s32.totalorder %s30, 1
    %p242 = por %p240, %p241
    %p244 = scmp.ne.s32.totalorder %s229, %s243
    %p245 = scmp.eq.s32.totalorder %s30, 0
    %p246 = por %p244, %p245
    %s248 = sadd.s32 %s247, 1
    %p251 = scmp.eq.s32.totalorder %s24, 1
    %p252 = scmp.ne.s32.totalorder %s247, %s249
    %p253 = scmp.eq.s32.totalorder %s24, 0
    %p254 = por %p252, %p253
    %p255 = scmp.ne.s32.totalorder %s247, %s249
    %p256 = scmp.eq.s32.totalorder %s29, 1
    %p257 = por %p255, %p256
    %p258 = scmp.ne.s32.totalorder %s249, %s250
    %p259 = scmp.eq.s32.totalorder %s29, 0
    %p260 = por %p258, %p259
    %p261 = scmp.ne.s32.totalorder %s249, %s250
    %p262 = scmp.eq.s32.totalorder %s30, 1
    %p263 = por %p261, %p262
    %p265 = scmp.ne.s32.totalorder %s250, %s264
    %p266 = scmp.eq.s32.totalorder %s30, 0
    %p267 = por %p265, %p266
    %s269 = sadd.s32 %s268, 1
    %p272 = scmp.eq.s32.totalorder %s24, 1
    %p273 = scmp.ne.s32.totalorder %s268, %s270
    %p274 = scmp.eq.s32.totalorder %s24, 0
    %p275 = por %p273, %p274
    %p276 = scmp.ne.s32.totalorder %s268, %s270
    %p277 = scmp.eq.s32.totalorder %s29, 1
    %p278 = por %p276, %p277
    %p279 = scmp.ne.s32.totalorder %s270, %s271
    %p280 = scmp.eq.s32.totalorder %s29, 0
    %p281 = por %p279, %p280
    %p282 = scmp.ne.s32.totalorder %s270, %s271
    %p283 = scmp.eq.s32.totalorder %s30, 1
    %p284 = por %p282, %p283
    %p286 = scmp.ne.s32.totalorder %s271, %s285
    %p287 = scmp.eq.s32.totalorder %s30, 0
    %p288 = por %p286, %p287
    %s290 = sadd.s32 %s289, 1
    %p293 = scmp.eq.s32.totalorder %s24, 1
    %p294 = scmp.ne.s32.totalorder %s289, %s291
    %p295 = scmp.eq.s32.totalorder %s24, 0
    %p296 = por %p294, %p295
    %p297 = scmp.ne.s32.totalorder %s289, %s291
    %p298 = scmp.eq.s32.totalorder %s29, 1
    %p299 = por %p297, %p298
    %p300 = scmp.ne.s32.totalorder %s291, %s292
    %p301 = scmp.eq.s32.totalorder %s29, 0
    %p302 = por %p300, %p301
    %p303 = scmp.ne.s32.totalorder %s291, %s292
    %p304 = scmp.eq.s32.totalorder %s30, 1
    %p305 = por %p303, %p304
    %p307 = scmp.ne.s32.totalorder %s292, %s306
    %p308 = scmp.eq.s32.totalorder %s30, 0
    %p309 = por %p307, %p308
    %s311 = sadd.s32 %s310, 1
    %p314 = scmp.eq.s32.totalorder %s24, 1
    %p315 = scmp.ne.s32.totalorder %s310, %s312
    %p316 = scmp.eq.s32.totalorder %s24, 0
    %p317 = por %p315, %p316
    %p318 = scmp.ne.s32.totalorder %s310, %s312
    %p319 = scmp.eq.s32.totalorder %s29, 1
    %p320 = por %p318, %p319
    %p321 = scmp.ne.s32.totalorder %s312, %s313
    %p322 = scmp.eq.s32.totalorder %s29, 0
    %p323 = por %p321, %p322
    %p324 = scmp.ne.s32.totalorder %s312, %s313
    %p325 = scmp.eq.s32.totalorder %s30, 1
    %p326 = por %p324, %p325
    %p328 = scmp.ne.s32.totalorder %s313, %s327
    %p329 = scmp.eq.s32.totalorder %s30, 0
    %p330 = por %p328, %p329
    %s332 = sadd.s32 %s331, 1
    %p335 = scmp.eq.s32.totalorder %s24, 1
    %p336 = scmp.ne.s32.totalorder %s331, %s333
    %p337 = scmp.eq.s32.totalorder %s24, 0
    %p338 = por %p336, %p337
    %p339 = scmp.ne.s32.totalorder %s331, %s333
    %p340 = scmp.eq.s32.totalorder %s29, 1
    %p341 = por %p339, %p340
    %p342 = scmp.ne.s32.totalorder %s333, %s334
    %p343 = scmp.eq.s32.totalorder %s29, 0
    %p344 = por %p342, %p343
    %p345 = scmp.ne.s32.totalorder %s333, %s334
    %p346 = scmp.eq.s32.totalorder %s30, 1
    %p347 = por %p345, %p346
    %p349 = scmp.ne.s32.totalorder %s334, %s348
    %p350 = scmp.eq.s32.totalorder %s30, 0
    %p351 = por %p349, %p350
    %s353 = sadd.s32 %s352, 1
    %p356 = scmp.eq.s32.totalorder %s24, 1
    %p357 = scmp.ne.s32.totalorder %s352, %s354
    %p358 = scmp.eq.s32.totalorder %s24, 0
    %p359 = por %p357, %p358
    %p360 = scmp.ne.s32.totalorder %s352, %s354
    %p361 = scmp.eq.s32.totalorder %s29, 1
    %p362 = por %p360, %p361
    %p363 = scmp.ne.s32.totalorder %s354, %s355
    %p364 = scmp.eq.s32.totalorder %s29, 0
    %p365 = por %p363, %p364
    %p366 = scmp.ne.s32.totalorder %s354, %s355
    %p367 = scmp.eq.s32.totalorder %s30, 1
    %p368 = por %p366, %p367
    %p370 = scmp.ne.s32.totalorder %s355, %s369
    %p371 = scmp.eq.s32.totalorder %s30, 0
    %p372 = por %p370, %p371
    %s374 = sadd.s32 %s373, 1
    %p377 = scmp.eq.s32.totalorder %s24, 1
    %p378 = scmp.ne.s32.totalorder %s373, %s375
    %p379 = scmp.eq.s32.totalorder %s24, 0
    %p380 = por %p378, %p379
    %p381 = scmp.ne.s32.totalorder %s373, %s375
    %p382 = scmp.eq.s32.totalorder %s29, 1
    %p383 = por %p381, %p382
    %p384 = scmp.ne.s32.totalorder %s375, %s376
    %p385 = scmp.eq.s32.totalorder %s29, 0
    %p386 = por %p384, %p385
    %p387 = scmp.ne.s32.totalorder %s375, %s376
    %p388 = scmp.eq.s32.totalorder %s30, 1
    %p389 = por %p387, %p388
    %p391 = scmp.ne.s32.totalorder %s376, %s390
    %p392 = scmp.eq.s32.totalorder %s30, 0
    %p393 = por %p391, %p392
    %s395 = sadd.s32 %s394, 1
    %p398 = scmp.eq.s32.totalorder %s24, 1
    %p399 = scmp.ne.s32.totalorder %s394, %s396
    %p400 = scmp.eq.s32.totalorder %s24, 0
    %p401 = por %p399, %p400
    %p402 = scmp.ne.s32.totalorder %s394, %s396
    %p403 = scmp.eq.s32.totalorder %s29, 1
    %p404 = por %p402, %p403
    %p405 = scmp.ne.s32.totalorder %s396, %s397
    %p406 = scmp.eq.s32.totalorder %s29, 0
    %p407 = por %p405, %p406
    %p408 = scmp.ne.s32.totalorder %s396, %s397
    %p409 = scmp.eq.s32.totalorder %s30, 1
    %p410 = por %p408, %p409
    %p412 = scmp.ne.s32.totalorder %s397, %s411
    %p413 = scmp.eq.s32.totalorder %s30, 0
    %p414 = por %p412, %p413
    %s415 = ssub.s32 %s24, %s31
    %p416 = scmp.eq.s32.totalorder %s415, 0
    %s418 = sadd.s32 %s417, 1
    %s419 = scalar_select %p416, %s417, %s418
    %p422 = pneg %p416
    %p423 = scmp.eq.s32.totalorder %s24, 1
    %p424 = por %p422, %p423
    %p425 = scmp.ne.s32.totalorder %s417, %s420
    %p426 = scmp.eq.s32.totalorder %s24, 0
    %p427 = por %p425, %p426
    %p428 = scmp.ne.s32.totalorder %s417, %s420
    %p429 = scmp.eq.s32.totalorder %s29, 1
    %p430 = por %p428, %p429
    %p431 = scmp.ne.s32.totalorder %s420, %s421
    %p432 = scmp.eq.s32.totalorder %s29, 0
    %p433 = por %p431, %p432
    %p434 = scmp.ne.s32.totalorder %s420, %s421
    %p435 = scmp.eq.s32.totalorder %s30, 1
    %p436 = por %p434, %p435
    %p438 = scmp.ne.s32.totalorder %s421, %s437
    %p439 = scmp.eq.s32.totalorder %s30, 0
    %p440 = por %p438, %p439
    %p441 = scmp.le.s32.totalorder 1, %s24
    %p442 = scmp.lt.s32.totalorder %s24, 3
    %p443 = pnand %p441, %p442
    %p444 = pneg %p443
    // Predicated region
    $region9: #{market_transformer_forward.1} parent=5 // pred_check
      _
    $region10: #{market_transformer_forward.1} parent=5 // pred_check_branch
      %446 = sbr.rel (%p443) target = $region12
    $region11: #{market_transformer_forward.1} parent=5 // pred_region
      %s447 = ssub.s32 %s24, 1
      // Predicated region
      $region13: #{market_transformer_forward.1} parent=11 // pred_check
        %p448 = pneg %p71
      $region14: #{market_transformer_forward.1} parent=11 // pred_check_branch
        %450 = sbr.rel (%p448) target = $region16
      $region15: #{market_transformer_forward.1} parent=11 // pred_region
        _
      $region16: #{market_transformer_forward.1} parent=11 // pred_fallthru
        _
      // Predicated region
      $region17: #{market_transformer_forward.1} parent=11 // pred_check
        %p451 = pneg %p92
      $region18: #{market_transformer_forward.1} parent=11 // pred_check_branch
        %453 = sbr.rel (%p451) target = $region20
      $region19: #{market_transformer_forward.1} parent=11 // pred_region
        _
      $region20: #{market_transformer_forward.1} parent=11 // pred_fallthru
        _
      // Predicated region
      $region21: #{market_transformer_forward.1} parent=11 // pred_check
        %p454 = pneg %p113
      $region22: #{market_transformer_forward.1} parent=11 // pred_check_branch
        %456 = sbr.rel (%p454) target = $region24
      $region23: #{market_transformer_forward.1} parent=11 // pred_region
        _
      $region24: #{market_transformer_forward.1} parent=11 // pred_fallthru
        _
      // Predicated region
      $region25: #{market_transformer_forward.1} parent=11 // pred_check
        %p457 = pneg %p134
      $region26: #{market_transformer_forward.1} parent=11 // pred_check_branch
        %459 = sbr.rel (%p457) target = $region28
      $region27: #{market_transformer_forward.1} parent=11 // pred_region
        _
      $region28: #{market_transformer_forward.1} parent=11 // pred_fallthru
        _
      // Predicated region
      $region29: #{market_transformer_forward.1} parent=11 // pred_check
        %p460 = pneg %p155
      $region30: #{market_transformer_forward.1} parent=11 // pred_check_branch
        %462 = sbr.rel (%p460) target = $region32
      $region31: #{market_transformer_forward.1} parent=11 // pred_region
        _
      $region32: #{market_transformer_forward.1} parent=11 // pred_fallthru
        _
      // Predicated region
      $region33: #{market_transformer_forward.1} parent=11 // pred_check
        %p463 = pneg %p176
      $region34: #{market_transformer_forward.1} parent=11 // pred_check_branch
        %465 = sbr.rel (%p463) target = $region36
      $region35: #{market_transformer_forward.1} parent=11 // pred_region
        _
      $region36: #{market_transformer_forward.1} parent=11 // pred_fallthru
        _
      // Predicated region
      $region37: #{market_transformer_forward.1} parent=11 // pred_check
        %p466 = pneg %p197
      $region38: #{market_transformer_forward.1} parent=11 // pred_check_branch
        %468 = sbr.rel (%p466) target = $region40
      $region39: #{market_transformer_forward.1} parent=11 // pred_region
        _
      $region40: #{market_transformer_forward.1} parent=11 // pred_fallthru
        _
      // Predicated region
      $region41: #{market_transformer_forward.1} parent=11 // pred_check
        %p469 = pneg %p218
      $region42: #{market_transformer_forward.1} parent=11 // pred_check_branch
        %471 = sbr.rel (%p469) target = $region44
      $region43: #{market_transformer_forward.1} parent=11 // pred_region
        _
      $region44: #{market_transformer_forward.1} parent=11 // pred_fallthru
        _
      // Predicated region
      $region45: #{market_transformer_forward.1} parent=11 // pred_check
        %p472 = pneg %p239
      $region46: #{market_transformer_forward.1} parent=11 // pred_check_branch
        %474 = sbr.rel (%p472) target = $region48
      $region47: #{market_transformer_forward.1} parent=11 // pred_region
        _
      $region48: #{market_transformer_forward.1} parent=11 // pred_fallthru
        _
      // Predicated region
      $region49: #{market_transformer_forward.1} parent=11 // pred_check
        %p475 = pneg %p260
      $region50: #{market_transformer_forward.1} parent=11 // pred_check_branch
        %477 = sbr.rel (%p475) target = $region52
      $region51: #{market_transformer_forward.1} parent=11 // pred_region
        _
      $region52: #{market_transformer_forward.1} parent=11 // pred_fallthru
        _
      // Predicated region
      $region53: #{market_transformer_forward.1} parent=11 // pred_check
        %p478 = pneg %p281
      $region54: #{market_transformer_forward.1} parent=11 // pred_check_branch
        %480 = sbr.rel (%p478) target = $region56
      $region55: #{market_transformer_forward.1} parent=11 // pred_region
        _
      $region56: #{market_transformer_forward.1} parent=11 // pred_fallthru
        _
      // Predicated region
      $region57: #{market_transformer_forward.1} parent=11 // pred_check
        %p481 = pneg %p302
      $region58: #{market_transformer_forward.1} parent=11 // pred_check_branch
        %483 = sbr.rel (%p481) target = $region60
      $region59: #{market_transformer_forward.1} parent=11 // pred_region
        _
      $region60: #{market_transformer_forward.1} parent=11 // pred_fallthru
        _
      // Predicated region
      $region61: #{market_transformer_forward.1} parent=11 // pred_check
        %p484 = pneg %p323
      $region62: #{market_transformer_forward.1} parent=11 // pred_check_branch
        %486 = sbr.rel (%p484) target = $region64
      $region63: #{market_transformer_forward.1} parent=11 // pred_region
        _
      $region64: #{market_transformer_forward.1} parent=11 // pred_fallthru
        _
      // Predicated region
      $region65: #{market_transformer_forward.1} parent=11 // pred_check
        %p487 = pneg %p344
      $region66: #{market_transformer_forward.1} parent=11 // pred_check_branch
        %489 = sbr.rel (%p487) target = $region68
      $region67: #{market_transformer_forward.1} parent=11 // pred_region
        _
      $region68: #{market_transformer_forward.1} parent=11 // pred_fallthru
        _
      // Predicated region
      $region69: #{market_transformer_forward.1} parent=11 // pred_check
        %p490 = pneg %p365
      $region70: #{market_transformer_forward.1} parent=11 // pred_check_branch
        %492 = sbr.rel (%p490) target = $region72
      $region71: #{market_transformer_forward.1} parent=11 // pred_region
        _
      $region72: #{market_transformer_forward.1} parent=11 // pred_fallthru
        _
      // Predicated region
      $region73: #{market_transformer_forward.1} parent=11 // pred_check
        %p493 = pneg %p386
      $region74: #{market_transformer_forward.1} parent=11 // pred_check_branch
        %495 = sbr.rel (%p493) target = $region76
      $region75: #{market_transformer_forward.1} parent=11 // pred_region
        _
      $region76: #{market_transformer_forward.1} parent=11 // pred_fallthru
        _
      // Predicated region
      $region77: #{market_transformer_forward.1} parent=11 // pred_check
        %p496 = pneg %p407
      $region78: #{market_transformer_forward.1} parent=11 // pred_check_branch
        %498 = sbr.rel (%p496) target = $region80
      $region79: #{market_transformer_forward.1} parent=11 // pred_region
        _
      $region80: #{market_transformer_forward.1} parent=11 // pred_fallthru
        _
    $region12: #{market_transformer_forward.1} parent=5 // pred_fallthru
      _
    %p499 = scmp.lt.s32.totalorder %s24, 2
    // Predicated region
    $region81: #{market_transformer_forward.1} parent=5 // pred_check
      %p500 = pneg %p499
    $region82: #{market_transformer_forward.1} parent=5 // pred_check_branch
      %502 = sbr.rel (%p500) target = $region84
    $region83: #{market_transformer_forward.1} parent=5 // pred_region
      // Predicated region
      $region85: #{market_transformer_forward.1} parent=83 // pred_check
        %p503 = pneg %p44
      $region86: #{market_transformer_forward.1} parent=83 // pred_check_branch
        %505 = sbr.rel (%p503) target = $region88
      $region87: #{market_transformer_forward.1} parent=83 // pred_region
        %p506 = scmp.lt.s32.totalorder %s24, 1
        %s507 = scalar_select %p506, %s24, 1
        %s508 = smul.addr %s507, 8
        %s509 = scalar_lea.vmem %s0, %s508
      $region88: #{market_transformer_forward.1} parent=83 // pred_fallthru
        _
    $region84: #{market_transformer_forward.1} parent=5 // pred_fallthru
      _
    %p510 = scmp.le.s32.totalorder 1, %s24
    %p511 = scmp.lt.s32.totalorder %s24, 3
    %p512 = pnand %p510, %p511
    %p513 = pneg %p512
    // Predicated region
    $region89: #{market_transformer_forward.1} parent=5 // pred_check
      _
    $region90: #{market_transformer_forward.1} parent=5 // pred_check_branch
      %515 = sbr.rel (%p512) target = $region92
    $region91: #{market_transformer_forward.1} parent=5 // pred_region
      %s516 = ssub.s32 %s24, 1
      %p517 = scmp.lt.s32.totalorder %s29, 1
      %s518 = scalar_select %p517, %s29, 1
      %s519 = smul.addr %s518, 8
      %s520 = scalar_lea.vmem %s0, %s519
      %p521 = pneg %p50
      %p522 = pneg %p47
      %p523 = pneg %p71
      %p524 = pneg %p68
      %p525 = pneg %p92
      %p526 = pneg %p89
      %p527 = pneg %p113
      %p528 = pneg %p110
      %p529 = pneg %p134
      %p530 = pneg %p131
      %p531 = pneg %p155
      %p532 = pneg %p152
      %p533 = pneg %p176
      %p534 = pneg %p173
      %p535 = pneg %p197
      %p536 = pneg %p194
      %p537 = pneg %p218
      %p538 = pneg %p215
      %p539 = pneg %p239
      %p540 = pneg %p236
      %p541 = pneg %p260
      %p542 = pneg %p257
      %p543 = pneg %p281
      %p544 = pneg %p278
      %p545 = pneg %p302
      %p546 = pneg %p299
      %p547 = pneg %p323
      %p548 = pneg %p320
      %p549 = pneg %p344
      %p550 = pneg %p341
      %p551 = pneg %p365
      %p552 = pneg %p362
      %p553 = pneg %p386
      %p554 = pneg %p383
      %p555 = pneg %p407
      %p556 = pneg %p404
      %p557 = pneg %p433
      %p558 = pneg %p430
      %p559 = scmp.lt.s32.totalorder %s29, 1
      %s560 = scalar_select %p559, %s29, 1
      %s561 = smul.addr %s560, 8
      %s562 = scalar_lea.vmem %s18, %s561
      %p563 = scmp.lt.s32.totalorder %s29, 1
      %s564 = scalar_select %p563, %s29, 1
      %s565 = smul.addr %s564, 8
      %s566 = scalar_lea.vmem %s0, %s565
      %p567 = scmp.lt.s32.totalorder %s29, 1
      %s568 = scalar_select %p567, %s29, 1
      %s569 = smul.addr %s568, 8
      %s570 = scalar_lea.vmem %s18, %s569
      %v572 = vld [vmem:[%s566] sm:$0xff]
      %v573 = vld [vmem:[%s2] sm:$0xff]
      %v574 = vld [vmem:[%s2 + $0x8] sm:$0xff]
      %v575 = vld [vmem:[%s2 + $0x10] sm:$0xff]
      %v576 = vld [vmem:[%s2 + $0x18] sm:$0xff]
      %v577 = vpack.c.bf16 %v572, %v572
      %v578 = vpack.c.bf16 %v574, %v573
      %v579 = vpack.c.bf16 %v576, %v575
      %v580 = vld [vmem:[%s3] sm:$0x1]
      %v582 = vperm.slane %v580, 0
      %vm584 = vcmask 130048
      %v586 = vsel %vm584, %v577, 0
      %v589 = vsel %vm584, %v578, 0
      %v592 = vsel %vm584, %v579, 0
      %594 = vmatpush.bf16.xpose.msra.mxu0 0
      %595 = vmatpush.bf16.xpose.msra.mxu0 0
      %596 = vmatpush.bf16.xpose.msra.mxu0 0
      %597 = vmatpush.bf16.xpose.msra.mxu0 0
      %598 = vmatpush.bf16.xpose.msra.mxu0 0
      %599 = vmatpush.bf16.xpose.msra.mxu0 0
      %600 = vmatpush.bf16.xpose.msra.mxu0 %v592
      %601 = vmatpush.bf16.xpose.msra.mxu0 %v589
      %602 = vmatmul.bf16.gmra.mxu0 %v586
      %v603 = vpop.f32.mrf.mxu0
      %v604 = vadd.f32 %v582, %v603
      %v605 = vpop.f32.mrf.mxu0
      %606 = vdwg.mxu0
      %v607 = vld [vmem:[%s1] sm:$0xff]
      %v608 = vadd.f32 %v604, %v607
      %v609 = vld [vmem:[%s4] sm:$0xff]
      %v610 = vld [vmem:[%s4 + $0x8] sm:$0xff]
      %v611 = vld [vmem:[%s4 + $0x10] sm:$0xff]
      %v612 = vld [vmem:[%s4 + $0x18] sm:$0xff]
      %v613 = vld [vmem:[%s4 + $0x20] sm:$0xff]
      %v614 = vld [vmem:[%s4 + $0x28] sm:$0xff]
      %v615 = vld [vmem:[%s4 + $0x30] sm:$0xff]
      %v616 = vld [vmem:[%s4 + $0x38] sm:$0xff]
      %v617 = vld [vmem:[%s4 + $0x40] sm:$0xff]
      %v618 = vld [vmem:[%s4 + $0x48] sm:$0xff]
      %v619 = vld [vmem:[%s4 + $0x50] sm:$0xff]
      %v620 = vld [vmem:[%s4 + $0x58] sm:$0xff]
      %v621 = vpack.c.bf16 %v608, %v608
      %v622 = vpack.c.bf16 %v610, %v609
      %v623 = vpack.c.bf16 %v612, %v611
      %v624 = vpack.c.bf16 %v614, %v613
      %v625 = vpack.c.bf16 %v616, %v615
      %v626 = vpack.c.bf16 %v618, %v617
      %v627 = vpack.c.bf16 %v620, %v619
      %v628 = vld [vmem:[%s5] sm:$0x1]
      %v630 = vperm.slane %v628, 0
      %vm632 = vcmask 261120
      %v634 = vsel %vm632, %v621, 0
      %v637 = vsel %vm632, %v622, 0
      %v640 = vsel %vm632, %v623, 0
      %v643 = vsel %vm632, %v624, 0
      %v646 = vsel %vm632, %v625, 0
      %v649 = vsel %vm632, %v626, 0
      %v652 = vsel %vm632, %v627, 0
      %654 = vmatpush.bf16.xpose.msra.mxu0 0
      %655 = vmatpush.bf16.xpose.msra.mxu0 0
      %656 = vmatpush.bf16.xpose.msra.mxu0 %v652
      %657 = vmatpush.bf16.xpose.msra.mxu0 %v649
      %658 = vmatpush.bf16.xpose.msra.mxu0 %v646
      %659 = vmatpush.bf16.xpose.msra.mxu0 %v643
      %660 = vmatpush.bf16.xpose.msra.mxu0 %v640
      %661 = vmatpush.bf16.xpose.msra.mxu0 %v637
      %662 = vmatmul.bf16.gmra.mxu0 %v634
      %v663 = vpop.f32.mrf.mxu0
      %v664 = vadd.f32 %v630, %v663
      %v665 = vpop.f32.mrf.mxu0
      %666 = vdwg.mxu0
      %v667 = vmul.f32 %v664, 0.35355338
      %v668 = vpack.c.bf16 %v667, %v667
      %v669 = vpack.c.bf16 %v664, %v664
      %671 = vrot.lane.b32.xlu0 %v669, 96
      %v672 = vpop.permute.xlu0 %671
      %vm673 = vcmask 64512
      %v675 = vsel %vm673, %v668, 0
      %v678 = vsel %vm673, %v672, 0
      %680 = vmatpush.bf16.xpose.msra.mxu0 0
      %681 = vmatpush.bf16.xpose.msra.mxu0 0
      %682 = vmatpush.bf16.xpose.msra.mxu0 0
      %683 = vmatpush.bf16.xpose.msra.mxu0 0
      %684 = vmatpush.bf16.xpose.msra.mxu0 0
      %685 = vmatpush.bf16.xpose.msra.mxu0 0
      %686 = vmatpush.bf16.xpose.msra.mxu0 0
      %687 = vmatpush.bf16.xpose.msra.mxu0 %v678
      %688 = vmatmul.bf16.gmra.mxu0 %v675
      %v689 = vpop.f32.mrf.mxu0
      %v690 = vadd.f32 0.0, %v689
      %v691 = vpop.f32.mrf.mxu0
      %692 = vdwg.mxu0
      %v693 = vsel %vm673, %v690, -inf
      %694 = vmax.xlane.f32.xlu0 %v693
      %v695 = vpop.xlane.xlu0 %694
      %v696 = vsub.f32 %v690, %v695
      %v697 = vmul.f32 %v696, 1.442695
      %v698 = vpow.pop %v697
      %v699 = vsel %vm673, %v698, 0.0
      %700 = vadd.xlane.f32.xlu0 %v699
      %v701 = vpop.xlane.xlu0 %700
      %v702 = vrcp.pop %v701
      %v703 = vmul.f32 %v698, %v702
      %v704 = vpack.c.bf16 %v703, %v703
      %705 = vrot.lane.b32.xlu0 %v669, 64
      %v706 = vpop.permute.xlu0 %705
      %v708 = vsel %vm673, %v704, 0
      %vm710 = vcmask 1043456
      %v712 = vsel %vm710, %v706, 0
      %714 = vmatpush.bf16.msra.mxu0 0
      %715 = vmatpush.bf16.msra.mxu0 0
      %716 = vmatpush.bf16.msra.mxu0 0
      %717 = vmatpush.bf16.msra.mxu0 0
      %718 = vmatpush.bf16.msra.mxu0 0
      %719 = vmatpush.bf16.msra.mxu0 0
      %720 = vmatpush.bf16.msra.mxu0 0
      %721 = vmatpush.bf16.msra.mxu0 %v712
      %722 = vmatmul.bf16.gmra.mxu0 %v708
      %v723 = vpop.f32.mrf.mxu0
      %v724 = vadd.f32 0.0, %v723
      %v725 = vpop.f32.mrf.mxu0
      %726 = vdwg.mxu0
      %728 = vrot.lane.b32.xlu0 %v668, 120
      %v729 = vpop.permute.xlu0 %728
      %730 = vrot.lane.b32.xlu0 %v669, 88
      %v731 = vpop.permute.xlu0 %730
      %v733 = vsel %vm673, %v729, 0
      %v736 = vsel %vm673, %v731, 0
      %738 = vmatpush.bf16.xpose.msra.mxu0 0
      %739 = vmatpush.bf16.xpose.msra.mxu0 0
      %740 = vmatpush.bf16.xpose.msra.mxu0 0
      %741 = vmatpush.bf16.xpose.msra.mxu0 0
      %742 = vmatpush.bf16.xpose.msra.mxu0 0
      %743 = vmatpush.bf16.xpose.msra.mxu0 0
      %744 = vmatpush.bf16.xpose.msra.mxu0 0
      %745 = vmatpush.bf16.xpose.msra.mxu0 %v736
      %746 = vmatmul.bf16.gmra.mxu0 %v733
      %v747 = vpop.f32.mrf.mxu0
      %v748 = vadd.f32 0.0, %v747
      %v749 = vpop.f32.mrf.mxu0
      %750 = vdwg.mxu0
      %v751 = vsel %vm673, %v748, -inf
      %752 = vmax.xlane.f32.xlu0 %v751
      %v753 = vpop.xlane.xlu0 %752
      %v754 = vsub.f32 %v748, %v753
      %v755 = vmul.f32 %v754, 1.442695
      %v756 = vpow.pop %v755
      %v757 = vsel %vm673, %v756, 0.0
      %758 = vadd.xlane.f32.xlu0 %v757
      %v759 = vpop.xlane.xlu0 %758
      %v760 = vrcp.pop %v759
      %v761 = vmul.f32 %v756, %v760
      %v762 = vpack.c.bf16 %v761, %v761
      %763 = vrot.lane.b32.xlu0 %v669, 56
      %v764 = vpop.permute.xlu0 %763
      %v766 = vsel %vm673, %v762, 0
      %v769 = vsel %vm710, %v764, 0
      %771 = vmatpush.bf16.msra.mxu0 0
      %772 = vmatpush.bf16.msra.mxu0 0
      %773 = vmatpush.bf16.msra.mxu0 0
      %774 = vmatpush.bf16.msra.mxu0 0
      %775 = vmatpush.bf16.msra.mxu0 0
      %776 = vmatpush.bf16.msra.mxu0 0
      %777 = vmatpush.bf16.msra.mxu0 0
      %778 = vmatpush.bf16.msra.mxu0 %v769
      %779 = vmatmul.bf16.gmra.mxu0 %v766
      %v780 = vpop.f32.mrf.mxu0
      %v781 = vadd.f32 0.0, %v780
      %v782 = vpop.f32.mrf.mxu0
      %783 = vdwg.mxu0
      %784 = vrot.lane.b32.xlu0 %v668, 112
      %v785 = vpop.permute.xlu0 %784
      %786 = vrot.lane.b32.xlu0 %v669, 80
      %v787 = vpop.permute.xlu0 %786
      %v789 = vsel %vm673, %v785, 0
      %v792 = vsel %vm673, %v787, 0
      %794 = vmatpush.bf16.xpose.msra.mxu0 0
      %795 = vmatpush.bf16.xpose.msra.mxu0 0
      %796 = vmatpush.bf16.xpose.msra.mxu0 0
      %797 = vmatpush.bf16.xpose.msra.mxu0 0
      %798 = vmatpush.bf16.xpose.msra.mxu0 0
      %799 = vmatpush.bf16.xpose.msra.mxu0 0
      %800 = vmatpush.bf16.xpose.msra.mxu0 0
      %801 = vmatpush.bf16.xpose.msra.mxu0 %v792
      %802 = vmatmul.bf16.gmra.mxu0 %v789
      %v803 = vpop.f32.mrf.mxu0
      %v804 = vadd.f32 0.0, %v803
      %v805 = vpop.f32.mrf.mxu0
      %806 = vdwg.mxu0
      %v807 = vsel %vm673, %v804, -inf
      %808 = vmax.xlane.f32.xlu0 %v807
      %v809 = vpop.xlane.xlu0 %808
      %v810 = vsub.f32 %v804, %v809
      %v811 = vmul.f32 %v810, 1.442695
      %v812 = vpow.pop %v811
      %v813 = vsel %vm673, %v812, 0.0
      %814 = vadd.xlane.f32.xlu0 %v813
      %v815 = vpop.xlane.xlu0 %814
      %v816 = vrcp.pop %v815
      %v817 = vmul.f32 %v812, %v816
      %v818 = vpack.c.bf16 %v817, %v817
      %819 = vrot.lane.b32.xlu0 %v669, 48
      %v820 = vpop.permute.xlu0 %819
      %v822 = vsel %vm673, %v818, 0
      %v825 = vsel %vm710, %v820, 0
      %827 = vmatpush.bf16.msra.mxu0 0
      %828 = vmatpush.bf16.msra.mxu0 0
      %829 = vmatpush.bf16.msra.mxu0 0
      %830 = vmatpush.bf16.msra.mxu0 0
      %831 = vmatpush.bf16.msra.mxu0 0
      %832 = vmatpush.bf16.msra.mxu0 0
      %833 = vmatpush.bf16.msra.mxu0 0
      %834 = vmatpush.bf16.msra.mxu0 %v825
      %835 = vmatmul.bf16.gmra.mxu0 %v822
      %v836 = vpop.f32.mrf.mxu0
      %v837 = vadd.f32 0.0, %v836
      %v838 = vpop.f32.mrf.mxu0
      %839 = vdwg.mxu0
      %840 = vrot.lane.b32.xlu0 %v668, 104
      %v841 = vpop.permute.xlu0 %840
      %842 = vrot.lane.b32.xlu0 %v669, 72
      %v843 = vpop.permute.xlu0 %842
      %v845 = vsel %vm673, %v841, 0
      %v848 = vsel %vm673, %v843, 0
      %850 = vmatpush.bf16.xpose.msra.mxu0 0
      %851 = vmatpush.bf16.xpose.msra.mxu0 0
      %852 = vmatpush.bf16.xpose.msra.mxu0 0
      %853 = vmatpush.bf16.xpose.msra.mxu0 0
      %854 = vmatpush.bf16.xpose.msra.mxu0 0
      %855 = vmatpush.bf16.xpose.msra.mxu0 0
      %856 = vmatpush.bf16.xpose.msra.mxu0 0
      %857 = vmatpush.bf16.xpose.msra.mxu0 %v848
      %858 = vmatmul.bf16.gmra.mxu0 %v845
      %v859 = vpop.f32.mrf.mxu0
      %v860 = vadd.f32 0.0, %v859
      %v861 = vpop.f32.mrf.mxu0
      %862 = vdwg.mxu0
      %v863 = vsel %vm673, %v860, -inf
      %864 = vmax.xlane.f32.xlu0 %v863
      %v865 = vpop.xlane.xlu0 %864
      %v866 = vsub.f32 %v860, %v865
      %v867 = vmul.f32 %v866, 1.442695
      %v868 = vpow.pop %v867
      %v869 = vsel %vm673, %v868, 0.0
      %870 = vadd.xlane.f32.xlu0 %v869
      %v871 = vpop.xlane.xlu0 %870
      %v872 = vrcp.pop %v871
      %v873 = vmul.f32 %v868, %v872
      %v874 = vpack.c.bf16 %v873, %v873
      %875 = vrot.lane.b32.xlu0 %v669, 40
      %v876 = vpop.permute.xlu0 %875
      %v878 = vsel %vm673, %v874, 0
      %v881 = vsel %vm710, %v876, 0
      %883 = vmatpush.bf16.msra.mxu0 0
      %884 = vmatpush.bf16.msra.mxu0 0
      %885 = vmatpush.bf16.msra.mxu0 0
      %886 = vmatpush.bf16.msra.mxu0 0
      %887 = vmatpush.bf16.msra.mxu0 0
      %888 = vmatpush.bf16.msra.mxu0 0
      %889 = vmatpush.bf16.msra.mxu0 0
      %890 = vmatpush.bf16.msra.mxu0 %v881
      %891 = vmatmul.bf16.gmra.mxu0 %v878
      %v892 = vpop.f32.mrf.mxu0
      %v893 = vadd.f32 0.0, %v892
      %v894 = vpop.f32.mrf.mxu0
      %895 = vdwg.mxu0
      %897 = vrot.lane.b32.xlu0 %v781, 8
      %v898 = vpop.permute.xlu0 %897
      %901 = vrot.lane.b32.xlu0 %v837, 16
      %v902 = vpop.permute.xlu0 %901
      %905 = vrot.lane.b32.xlu0 %v893, 24
      %v906 = vpop.permute.xlu0 %905
      %v908 = vsel %vm673, %v724, %v898
      %v909 = vsel %vm584, %v908, %v902
      %vm910 = vcmask 195584
      %v911 = vsel %vm910, %v909, %v906
      %v912 = vld [vmem:[%s6] sm:$0xff]
      %v913 = vld [vmem:[%s6 + $0x8] sm:$0xff]
      %v914 = vld [vmem:[%s6 + $0x10] sm:$0xff]
      %v915 = vld [vmem:[%s6 + $0x18] sm:$0xff]
      %v916 = vpack.c.bf16 %v911, %v911
      %v917 = vpack.c.bf16 %v913, %v912
      %v918 = vpack.c.bf16 %v915, %v914
      %v919 = vld [vmem:[%s7] sm:$0x1]
      %v921 = vperm.slane %v919, 0
      %v924 = vsel %vm632, %v916, 0
      %v927 = vsel %vm632, %v917, 0
      %v930 = vsel %vm632, %v918, 0
      %932 = vmatpush.bf16.xpose.msra.mxu0 0
      %933 = vmatpush.bf16.xpose.msra.mxu0 0
      %934 = vmatpush.bf16.xpose.msra.mxu0 0
      %935 = vmatpush.bf16.xpose.msra.mxu0 0
      %936 = vmatpush.bf16.xpose.msra.mxu0 0
      %937 = vmatpush.bf16.xpose.msra.mxu0 0
      %938 = vmatpush.bf16.xpose.msra.mxu0 %v930
      %939 = vmatpush.bf16.xpose.msra.mxu0 %v927
      %940 = vmatmul.bf16.gmra.mxu0 %v924
      %v941 = vpop.f32.mrf.mxu0
      %v942 = vadd.f32 %v921, %v941
      %v943 = vpop.f32.mrf.mxu0
      %944 = vdwg.mxu0
      %v945 = vadd.f32 %v608, %v942
      %v946 = vld [vmem:[%s8] sm:$0x1]
      %v947 = vld [vmem:[%s9] sm:$0x1]
      %v948 = vsel %vm632, %v945, 0.0
      %949 = vadd.xlane.f32.xlu0 %v948
      %v950 = vpop.xlane.xlu0 %949
      %v951 = vrcp.pop 32.0
      %v952 = vmul.f32 32.0, %v951
      %v953 = vsub.f32 1.0, %v952
      %v954 = vmul.f32 %v951, %v953
      %v955 = vadd.f32 %v951, %v954
      %vm956 = vweird.f32 %v951
      %v957 = vsel %vm956, %v951, %v955
      %v958 = vmul.f32 %v950, %v957
      %v959 = vsub.f32 %v945, %v958
      %v960 = vmul.f32 %v959, %v959
      %v961 = vsel %vm632, %v960, 0.0
      %962 = vadd.xlane.f32.xlu0 %v961
      %v963 = vpop.xlane.xlu0 %962
      %v964 = vmul.f32 %v963, %v957
      %v965 = vadd.f32 %v964, 1e-05
      %v966 = vrsqrt.pop %v965
      %v967 = vmul.f32 %v966, %v965
      %v968 = vmul.f32 %v967, %v966
      %v969 = vmul.f32 0.5, %v968
      %v970 = vsub.f32 1.5, %v969
      %v971 = vmul.f32 %v966, %v970
      %vm972 = vweird.f32 %v965
      %vm973 = vweird.f32 %v966
      %vm974 = vmor %vm972, %vm973
      %v975 = vsel %vm974, %v966, %v971
      %v976 = vmul.f32 %v959, %v975
      %v978 = vperm.slane %v946, 0
      %v980 = vmul.f32 %v976, %v978
      %v982 = vperm.slane %v947, 0
      %v984 = vadd.f32 %v980, %v982
      %v985 = vld [vmem:[%s10] sm:$0xff]
      %v986 = vld [vmem:[%s10 + $0x8] sm:$0xff]
      %v987 = vld [vmem:[%s10 + $0x10] sm:$0xff]
      %v988 = vld [vmem:[%s10 + $0x18] sm:$0xff]
      %v989 = vld [vmem:[%s10 + $0x20] sm:$0xff]
      %v990 = vld [vmem:[%s10 + $0x28] sm:$0xff]
      %v991 = vld [vmem:[%s10 + $0x30] sm:$0xff]
      %v992 = vld [vmem:[%s10 + $0x38] sm:$0xff]
      %v993 = vpack.c.bf16 %v984, %v984
      %v994 = vpack.c.bf16 %v986, %v985
      %v995 = vpack.c.bf16 %v988, %v987
      %v996 = vpack.c.bf16 %v990, %v989
      %v997 = vpack.c.bf16 %v992, %v991
      %v998 = vld [vmem:[%s11] sm:$0x1]
      %v1000 = vperm.slane %v998, 0
      %v1003 = vsel %vm632, %v993, 0
      %v1006 = vsel %vm632, %v994, 0
      %v1009 = vsel %vm632, %v995, 0
      %v1012 = vsel %vm632, %v996, 0
      %v1015 = vsel %vm632, %v997, 0
      %1017 = vmatpush.bf16.xpose.msra.mxu0 0
      %1018 = vmatpush.bf16.xpose.msra.mxu0 0
      %1019 = vmatpush.bf16.xpose.msra.mxu0 0
      %1020 = vmatpush.bf16.xpose.msra.mxu0 0
      %1021 = vmatpush.bf16.xpose.msra.mxu0 %v1015
      %1022 = vmatpush.bf16.xpose.msra.mxu0 %v1012
      %1023 = vmatpush.bf16.xpose.msra.mxu0 %v1009
      %1024 = vmatpush.bf16.xpose.msra.mxu0 %v1006
      %1025 = vmatmul.bf16.gmra.mxu0 %v1003
      %v1026 = vpop.f32.mrf.mxu0
      %v1027 = vadd.f32 %v1000, %v1026
      %v1028 = vpop.f32.mrf.mxu0
      %1029 = vdwg.mxu0
      %v1030 = vmax.f32 %v1027, 0.0
      %v1031 = vld [vmem:[%s12] sm:$0xff]
      %v1032 = vld [vmem:[%s12 + $0x8] sm:$0xff]
      %v1033 = vld [vmem:[%s12 + $0x10] sm:$0xff]
      %v1034 = vld [vmem:[%s12 + $0x18] sm:$0xff]
      %v1035 = vpack.c.bf16 %v1030, %v1030
      %v1036 = vpack.c.bf16 %v1032, %v1031
      %v1037 = vpack.c.bf16 %v1034, %v1033
      %v1038 = vld [vmem:[%s13] sm:$0x1]
      %v1040 = vperm.slane %v1038, 0
      %vm1042 = vcmask 523264
      %v1044 = vsel %vm1042, %v1035, 0
      %v1047 = vsel %vm1042, %v1036, 0
      %v1050 = vsel %vm1042, %v1037, 0
      %1052 = vmatpush.bf16.xpose.msra.mxu0 0
      %1053 = vmatpush.bf16.xpose.msra.mxu0 0
      %1054 = vmatpush.bf16.xpose.msra.mxu0 0
      %1055 = vmatpush.bf16.xpose.msra.mxu0 0
      %1056 = vmatpush.bf16.xpose.msra.mxu0 0
      %1057 = vmatpush.bf16.xpose.msra.mxu0 0
      %1058 = vmatpush.bf16.xpose.msra.mxu0 %v1050
      %1059 = vmatpush.bf16.xpose.msra.mxu0 %v1047
      %1060 = vmatmul.bf16.gmra.mxu0 %v1044
      %v1061 = vpop.f32.mrf.mxu0
      %v1062 = vadd.f32 %v1040, %v1061
      %v1063 = vpop.f32.mrf.mxu0
      %1064 = vdwg.mxu0
      %v1065 = vadd.f32 %v984, %v1062
      %v1066 = vld [vmem:[%s14] sm:$0x1]
      %v1067 = vld [vmem:[%s15] sm:$0x1]
      %v1068 = vsel %vm632, %v1065, 0.0
      %1069 = vadd.xlane.f32.xlu0 %v1068
      %v1070 = vpop.xlane.xlu0 %1069
      %v1071 = vmul.f32 %v1070, %v957
      %v1072 = vsub.f32 %v1065, %v1071
      %v1073 = vmul.f32 %v1072, %v1072
      %v1074 = vsel %vm632, %v1073, 0.0
      %1075 = vadd.xlane.f32.xlu0 %v1074
      %v1076 = vpop.xlane.xlu0 %1075
      %v1077 = vmul.f32 %v1076, %v957
      %v1078 = vadd.f32 %v1077, 1e-05
      %v1079 = vrsqrt.pop %v1078
      %v1080 = vmul.f32 %v1079, %v1078
      %v1081 = vmul.f32 %v1080, %v1079
      %v1082 = vmul.f32 0.5, %v1081
      %v1083 = vsub.f32 1.5, %v1082
      %v1084 = vmul.f32 %v1079, %v1083
      %vm1085 = vweird.f32 %v1078
      %vm1086 = vweird.f32 %v1079
      %vm1087 = vmor %vm1085, %vm1086
      %v1088 = vsel %vm1087, %v1079, %v1084
      %v1089 = vmul.f32 %v1072, %v1088
      %v1091 = vperm.slane %v1066, 0
      %v1093 = vmul.f32 %v1089, %v1091
      %v1095 = vperm.slane %v1067, 0
      %v1097 = vadd.f32 %v1093, %v1095
      %s1098 = scalar_lea.vmem %s4, 96
      %v1099 = vld [vmem:[%s1098] sm:$0xff]
      %v1100 = vld [vmem:[%s1098 + $0x8] sm:$0xff]
      %v1101 = vld [vmem:[%s1098 + $0x10] sm:$0xff]
      %v1102 = vld [vmem:[%s1098 + $0x18] sm:$0xff]
      %v1103 = vld [vmem:[%s1098 + $0x20] sm:$0xff]
      %v1104 = vld [vmem:[%s1098 + $0x28] sm:$0xff]
      %v1105 = vld [vmem:[%s1098 + $0x30] sm:$0xff]
      %v1106 = vld [vmem:[%s1098 + $0x38] sm:$0xff]
      %v1107 = vld [vmem:[%s1098 + $0x40] sm:$0xff]
      %v1108 = vld [vmem:[%s1098 + $0x48] sm:$0xff]
      %v1109 = vld [vmem:[%s1098 + $0x50] sm:$0xff]
      %v1110 = vld [vmem:[%s1098 + $0x58] sm:$0xff]
      %v1111 = vpack.c.bf16 %v1097, %v1097
      %v1112 = vpack.c.bf16 %v1100, %v1099
      %v1113 = vpack.c.bf16 %v1102, %v1101
      %v1114 = vpack.c.bf16 %v1104, %v1103
      %v1115 = vpack.c.bf16 %v1106, %v1105
      %v1116 = vpack.c.bf16 %v1108, %v1107
      %v1117 = vpack.c.bf16 %v1110, %v1109
      %s1118 = scalar_lea.vmem %s5, 1
      %v1119 = vld [vmem:[%s1118] sm:$0x1]
      %v1121 = vperm.slane %v1119, 0
      %v1124 = vsel %vm632, %v1111, 0
      %v1127 = vsel %vm632, %v1112, 0
      %v1130 = vsel %vm632, %v1113, 0
      %v1133 = vsel %vm632, %v1114, 0
      %v1136 = vsel %vm632, %v1115, 0
      %v1139 = vsel %vm632, %v1116, 0
      %v1142 = vsel %vm632, %v1117, 0
      %1144 = vmatpush.bf16.xpose.msra.mxu0 0
      %1145 = vmatpush.bf16.xpose.msra.mxu0 0
      %1146 = vmatpush.bf16.xpose.msra.mxu0 %v1142
      %1147 = vmatpush.bf16.xpose.msra.mxu0 %v1139
      %1148 = vmatpush.bf16.xpose.msra.mxu0 %v1136
      %1149 = vmatpush.bf16.xpose.msra.mxu0 %v1133
      %1150 = vmatpush.bf16.xpose.msra.mxu0 %v1130
      %1151 = vmatpush.bf16.xpose.msra.mxu0 %v1127
      %1152 = vmatmul.bf16.gmra.mxu0 %v1124
      %v1153 = vpop.f32.mrf.mxu0
      %v1154 = vadd.f32 %v1121, %v1153
      %v1155 = vpop.f32.mrf.mxu0
      %1156 = vdwg.mxu0
      %v1157 = vmul.f32 %v1154, 0.35355338
      %v1158 = vpack.c.bf16 %v1157, %v1157
      %v1159 = vpack.c.bf16 %v1154, %v1154
      %1161 = vrot.lane.b32.xlu0 %v1159, 96
      %v1162 = vpop.permute.xlu0 %1161
      %v1164 = vsel %vm673, %v1158, 0
      %v1167 = vsel %vm673, %v1162, 0
      %1169 = vmatpush.bf16.xpose.msra.mxu0 0
      %1170 = vmatpush.bf16.xpose.msra.mxu0 0
      %1171 = vmatpush.bf16.xpose.msra.mxu0 0
      %1172 = vmatpush.bf16.xpose.msra.mxu0 0
      %1173 = vmatpush.bf16.xpose.msra.mxu0 0
      %1174 = vmatpush.bf16.xpose.msra.mxu0 0
      %1175 = vmatpush.bf16.xpose.msra.mxu0 0
      %1176 = vmatpush.bf16.xpose.msra.mxu0 %v1167
      %1177 = vmatmul.bf16.gmra.mxu0 %v1164
      %v1178 = vpop.f32.mrf.mxu0
      %v1179 = vadd.f32 0.0, %v1178
      %v1180 = vpop.f32.mrf.mxu0
      %1181 = vdwg.mxu0
      %v1182 = vsel %vm673, %v1179, -inf
      %1183 = vmax.xlane.f32.xlu0 %v1182
      %v1184 = vpop.xlane.xlu0 %1183
      %v1185 = vsub.f32 %v1179, %v1184
      %v1186 = vmul.f32 %v1185, 1.442695
      %v1187 = vpow.pop %v1186
      %v1188 = vsel %vm673, %v1187, 0.0
      %1189 = vadd.xlane.f32.xlu0 %v1188
      %v1190 = vpop.xlane.xlu0 %1189
      %v1191 = vrcp.pop %v1190
      %v1192 = vmul.f32 %v1187, %v1191
      %v1193 = vpack.c.bf16 %v1192, %v1192
      %1194 = vrot.lane.b32.xlu0 %v1159, 64
      %v1195 = vpop.permute.xlu0 %1194
      %v1197 = vsel %vm673, %v1193, 0
      %v1200 = vsel %vm710, %v1195, 0
      %1202 = vmatpush.bf16.msra.mxu0 0
      %1203 = vmatpush.bf16.msra.mxu0 0
      %1204 = vmatpush.bf16.msra.mxu0 0
      %1205 = vmatpush.bf16.msra.mxu0 0
      %1206 = vmatpush.bf16.msra.mxu0 0
      %1207 = vmatpush.bf16.msra.mxu0 0
      %1208 = vmatpush.bf16.msra.mxu0 0
      %1209 = vmatpush.bf16.msra.mxu0 %v1200
      %1210 = vmatmul.bf16.gmra.mxu0 %v1197
      %v1211 = vpop.f32.mrf.mxu0
      %v1212 = vadd.f32 0.0, %v1211
      %v1213 = vpop.f32.mrf.mxu0
      %1214 = vdwg.mxu0
      %1216 = vrot.lane.b32.xlu0 %v1158, 120
      %v1217 = vpop.permute.xlu0 %1216
      %1218 = vrot.lane.b32.xlu0 %v1159, 88
      %v1219 = vpop.permute.xlu0 %1218
      %v1221 = vsel %vm673, %v1217, 0
      %v1224 = vsel %vm673, %v1219, 0
      %1226 = vmatpush.bf16.xpose.msra.mxu0 0
      %1227 = vmatpush.bf16.xpose.msra.mxu0 0
      %1228 = vmatpush.bf16.xpose.msra.mxu0 0
      %1229 = vmatpush.bf16.xpose.msra.mxu0 0
      %1230 = vmatpush.bf16.xpose.msra.mxu0 0
      %1231 = vmatpush.bf16.xpose.msra.mxu0 0
      %1232 = vmatpush.bf16.xpose.msra.mxu0 0
      %1233 = vmatpush.bf16.xpose.msra.mxu0 %v1224
      %1234 = vmatmul.bf16.gmra.mxu0 %v1221
      %v1235 = vpop.f32.mrf.mxu0
      %v1236 = vadd.f32 0.0, %v1235
      %v1237 = vpop.f32.mrf.mxu0
      %1238 = vdwg.mxu0
      %v1239 = vsel %vm673, %v1236, -inf
      %1240 = vmax.xlane.f32.xlu0 %v1239
      %v1241 = vpop.xlane.xlu0 %1240
      %v1242 = vsub.f32 %v1236, %v1241
      %v1243 = vmul.f32 %v1242, 1.442695
      %v1244 = vpow.pop %v1243
      %v1245 = vsel %vm673, %v1244, 0.0
      %1246 = vadd.xlane.f32.xlu0 %v1245
      %v1247 = vpop.xlane.xlu0 %1246
      %v1248 = vrcp.pop %v1247
      %v1249 = vmul.f32 %v1244, %v1248
      %v1250 = vpack.c.bf16 %v1249, %v1249
      %1251 = vrot.lane.b32.xlu0 %v1159, 56
      %v1252 = vpop.permute.xlu0 %1251
      %v1254 = vsel %vm673, %v1250, 0
      %v1257 = vsel %vm710, %v1252, 0
      %1259 = vmatpush.bf16.msra.mxu0 0
      %1260 = vmatpush.bf16.msra.mxu0 0
      %1261 = vmatpush.bf16.msra.mxu0 0
      %1262 = vmatpush.bf16.msra.mxu0 0
      %1263 = vmatpush.bf16.msra.mxu0 0
      %1264 = vmatpush.bf16.msra.mxu0 0
      %1265 = vmatpush.bf16.msra.mxu0 0
      %1266 = vmatpush.bf16.msra.mxu0 %v1257
      %1267 = vmatmul.bf16.gmra.mxu0 %v1254
      %v1268 = vpop.f32.mrf.mxu0
      %v1269 = vadd.f32 0.0, %v1268
      %v1270 = vpop.f32.mrf.mxu0
      %1271 = vdwg.mxu0
      %1272 = vrot.lane.b32.xlu0 %v1158, 112
      %v1273 = vpop.permute.xlu0 %1272
      %1274 = vrot.lane.b32.xlu0 %v1159, 80
      %v1275 = vpop.permute.xlu0 %1274
      %v1277 = vsel %vm673, %v1273, 0
      %v1280 = vsel %vm673, %v1275, 0
      %1282 = vmatpush.bf16.xpose.msra.mxu0 0
      %1283 = vmatpush.bf16.xpose.msra.mxu0 0
      %1284 = vmatpush.bf16.xpose.msra.mxu0 0
      %1285 = vmatpush.bf16.xpose.msra.mxu0 0
      %1286 = vmatpush.bf16.xpose.msra.mxu0 0
      %1287 = vmatpush.bf16.xpose.msra.mxu0 0
      %1288 = vmatpush.bf16.xpose.msra.mxu0 0
      %1289 = vmatpush.bf16.xpose.msra.mxu0 %v1280
      %1290 = vmatmul.bf16.gmra.mxu0 %v1277
      %v1291 = vpop.f32.mrf.mxu0
      %v1292 = vadd.f32 0.0, %v1291
      %v1293 = vpop.f32.mrf.mxu0
      %1294 = vdwg.mxu0
      %v1295 = vsel %vm673, %v1292, -inf
      %1296 = vmax.xlane.f32.xlu0 %v1295
      %v1297 = vpop.xlane.xlu0 %1296
      %v1298 = vsub.f32 %v1292, %v1297
      %v1299 = vmul.f32 %v1298, 1.442695
      %v1300 = vpow.pop %v1299
      %v1301 = vsel %vm673, %v1300, 0.0
      %1302 = vadd.xlane.f32.xlu0 %v1301
      %v1303 = vpop.xlane.xlu0 %1302
      %v1304 = vrcp.pop %v1303
      %v1305 = vmul.f32 %v1300, %v1304
      %v1306 = vpack.c.bf16 %v1305, %v1305
      %1307 = vrot.lane.b32.xlu0 %v1159, 48
      %v1308 = vpop.permute.xlu0 %1307
      %v1310 = vsel %vm673, %v1306, 0
      %v1313 = vsel %vm710, %v1308, 0
      %1315 = vmatpush.bf16.msra.mxu0 0
      %1316 = vmatpush.bf16.msra.mxu0 0
      %1317 = vmatpush.bf16.msra.mxu0 0
      %1318 = vmatpush.bf16.msra.mxu0 0
      %1319 = vmatpush.bf16.msra.mxu0 0
      %1320 = vmatpush.bf16.msra.mxu0 0
      %1321 = vmatpush.bf16.msra.mxu0 0
      %1322 = vmatpush.bf16.msra.mxu0 %v1313
      %1323 = vmatmul.bf16.gmra.mxu0 %v1310
      %v1324 = vpop.f32.mrf.mxu0
      %v1325 = vadd.f32 0.0, %v1324
      %v1326 = vpop.f32.mrf.mxu0
      %1327 = vdwg.mxu0
      %1328 = vrot.lane.b32.xlu0 %v1158, 104
      %v1329 = vpop.permute.xlu0 %1328
      %1330 = vrot.lane.b32.xlu0 %v1159, 72
      %v1331 = vpop.permute.xlu0 %1330
      %v1333 = vsel %vm673, %v1329, 0
      %v1336 = vsel %vm673, %v1331, 0
      %1338 = vmatpush.bf16.xpose.msra.mxu0 0
      %1339 = vmatpush.bf16.xpose.msra.mxu0 0
      %1340 = vmatpush.bf16.xpose.msra.mxu0 0
      %1341 = vmatpush.bf16.xpose.msra.mxu0 0
      %1342 = vmatpush.bf16.xpose.msra.mxu0 0
      %1343 = vmatpush.bf16.xpose.msra.mxu0 0
      %1344 = vmatpush.bf16.xpose.msra.mxu0 0
      %1345 = vmatpush.bf16.xpose.msra.mxu0 %v1336
      %1346 = vmatmul.bf16.gmra.mxu0 %v1333
      %v1347 = vpop.f32.mrf.mxu0
      %v1348 = vadd.f32 0.0, %v1347
      %v1349 = vpop.f32.mrf.mxu0
      %1350 = vdwg.mxu0
      %v1351 = vsel %vm673, %v1348, -inf
      %1352 = vmax.xlane.f32.xlu0 %v1351
      %v1353 = vpop.xlane.xlu0 %1352
      %v1354 = vsub.f32 %v1348, %v1353
      %v1355 = vmul.f32 %v1354, 1.442695
      %v1356 = vpow.pop %v1355
      %v1357 = vsel %vm673, %v1356, 0.0
      %1358 = vadd.xlane.f32.xlu0 %v1357
      %v1359 = vpop.xlane.xlu0 %1358
      %v1360 = vrcp.pop %v1359
      %v1361 = vmul.f32 %v1356, %v1360
      %v1362 = vpack.c.bf16 %v1361, %v1361
      %1363 = vrot.lane.b32.xlu0 %v1159, 40
      %v1364 = vpop.permute.xlu0 %1363
      %v1366 = vsel %vm673, %v1362, 0
      %v1369 = vsel %vm710, %v1364, 0
      %1371 = vmatpush.bf16.msra.mxu0 0
      %1372 = vmatpush.bf16.msra.mxu0 0
      %1373 = vmatpush.bf16.msra.mxu0 0
      %1374 = vmatpush.bf16.msra.mxu0 0
      %1375 = vmatpush.bf16.msra.mxu0 0
      %1376 = vmatpush.bf16.msra.mxu0 0
      %1377 = vmatpush.bf16.msra.mxu0 0
      %1378 = vmatpush.bf16.msra.mxu0 %v1369
      %1379 = vmatmul.bf16.gmra.mxu0 %v1366
      %v1380 = vpop.f32.mrf.mxu0
      %v1381 = vadd.f32 0.0, %v1380
      %v1382 = vpop.f32.mrf.mxu0
      %1383 = vdwg.mxu0
      %1385 = vrot.lane.b32.xlu0 %v1269, 8
      %v1386 = vpop.permute.xlu0 %1385
      %1389 = vrot.lane.b32.xlu0 %v1325, 16
      %v1390 = vpop.permute.xlu0 %1389
      %1393 = vrot.lane.b32.xlu0 %v1381, 24
      %v1394 = vpop.permute.xlu0 %1393
      %v1396 = vsel %vm673, %v1212, %v1386
      %v1397 = vsel %vm584, %v1396, %v1390
      %v1398 = vsel %vm910, %v1397, %v1394
      %s1399 = scalar_lea.vmem %s6, 32
      %v1400 = vld [vmem:[%s1399] sm:$0xff]
      %v1401 = vld [vmem:[%s1399 + $0x8] sm:$0xff]
      %v1402 = vld [vmem:[%s1399 + $0x10] sm:$0xff]
      %v1403 = vld [vmem:[%s1399 + $0x18] sm:$0xff]
      %v1404 = vpack.c.bf16 %v1398, %v1398
      %v1405 = vpack.c.bf16 %v1401, %v1400
      %v1406 = vpack.c.bf16 %v1403, %v1402
      %s1407 = scalar_lea.vmem %s7, 1
      %v1408 = vld [vmem:[%s1407] sm:$0x1]
      %v1410 = vperm.slane %v1408, 0
      %v1413 = vsel %vm632, %v1404, 0
      %v1416 = vsel %vm632, %v1405, 0
      %v1419 = vsel %vm632, %v1406, 0
      %1421 = vmatpush.bf16.xpose.msra.mxu0 0
      %1422 = vmatpush.bf16.xpose.msra.mxu0 0
      %1423 = vmatpush.bf16.xpose.msra.mxu0 0
      %1424 = vmatpush.bf16.xpose.msra.mxu0 0
      %1425 = vmatpush.bf16.xpose.msra.mxu0 0
      %1426 = vmatpush.bf16.xpose.msra.mxu0 0
      %1427 = vmatpush.bf16.xpose.msra.mxu0 %v1419
      %1428 = vmatpush.bf16.xpose.msra.mxu0 %v1416
      %1429 = vmatmul.bf16.gmra.mxu0 %v1413
      %v1430 = vpop.f32.mrf.mxu0
      %v1431 = vadd.f32 %v1410, %v1430
      %v1432 = vpop.f32.mrf.mxu0
      %1433 = vdwg.mxu0
      %v1434 = vadd.f32 %v1097, %v1431
      %s1435 = scalar_lea.vmem %s8, 1
      %v1436 = vld [vmem:[%s1435] sm:$0x1]
      %s1437 = scalar_lea.vmem %s9, 1
      %v1438 = vld [vmem:[%s1437] sm:$0x1]
      %v1439 = vsel %vm632, %v1434, 0.0
      %1440 = vadd.xlane.f32.xlu0 %v1439
      %v1441 = vpop.xlane.xlu0 %1440
      %v1442 = vmul.f32 %v1441, %v957
      %v1443 = vsub.f32 %v1434, %v1442
      %v1444 = vmul.f32 %v1443, %v1443
      %v1445 = vsel %vm632, %v1444, 0.0
      %1446 = vadd.xlane.f32.xlu0 %v1445
      %v1447 = vpop.xlane.xlu0 %1446
      %v1448 = vmul.f32 %v1447, %v957
      %v1449 = vadd.f32 %v1448, 1e-05
      %v1450 = vrsqrt.pop %v1449
      %v1451 = vmul.f32 %v1450, %v1449
      %v1452 = vmul.f32 %v1451, %v1450
      %v1453 = vmul.f32 0.5, %v1452
      %v1454 = vsub.f32 1.5, %v1453
      %v1455 = vmul.f32 %v1450, %v1454
      %vm1456 = vweird.f32 %v1449
      %vm1457 = vweird.f32 %v1450
      %vm1458 = vmor %vm1456, %vm1457
      %v1459 = vsel %vm1458, %v1450, %v1455
      %v1460 = vmul.f32 %v1443, %v1459
      %v1462 = vperm.slane %v1436, 0
      %v1464 = vmul.f32 %v1460, %v1462
      %v1466 = vperm.slane %v1438, 0
      %v1468 = vadd.f32 %v1464, %v1466
      %s1469 = scalar_lea.vmem %s10, 64
      %v1470 = vld [vmem:[%s1469] sm:$0xff]
      %v1471 = vld [vmem:[%s1469 + $0x8] sm:$0xff]
      %v1472 = vld [vmem:[%s1469 + $0x10] sm:$0xff]
      %v1473 = vld [vmem:[%s1469 + $0x18] sm:$0xff]
      %v1474 = vld [vmem:[%s1469 + $0x20] sm:$0xff]
      %v1475 = vld [vmem:[%s1469 + $0x28] sm:$0xff]
      %v1476 = vld [vmem:[%s1469 + $0x30] sm:$0xff]
      %v1477 = vld [vmem:[%s1469 + $0x38] sm:$0xff]
      %v1478 = vpack.c.bf16 %v1468, %v1468
      %v1479 = vpack.c.bf16 %v1471, %v1470
      %v1480 = vpack.c.bf16 %v1473, %v1472
      %v1481 = vpack.c.bf16 %v1475, %v1474
      %v1482 = vpack.c.bf16 %v1477, %v1476
      %s1483 = scalar_lea.vmem %s11, 1
      %v1484 = vld [vmem:[%s1483] sm:$0x1]
      %v1486 = vperm.slane %v1484, 0
      %v1489 = vsel %vm632, %v1478, 0
      %v1492 = vsel %vm632, %v1479, 0
      %v1495 = vsel %vm632, %v1480, 0
      %v1498 = vsel %vm632, %v1481, 0
      %v1501 = vsel %vm632, %v1482, 0
      %1503 = vmatpush.bf16.xpose.msra.mxu0 0
      %1504 = vmatpush.bf16.xpose.msra.mxu0 0
      %1505 = vmatpush.bf16.xpose.msra.mxu0 0
      %1506 = vmatpush.bf16.xpose.msra.mxu0 0
      %1507 = vmatpush.bf16.xpose.msra.mxu0 %v1501
      %1508 = vmatpush.bf16.xpose.msra.mxu0 %v1498
      %1509 = vmatpush.bf16.xpose.msra.mxu0 %v1495
      %1510 = vmatpush.bf16.xpose.msra.mxu0 %v1492
      %1511 = vmatmul.bf16.gmra.mxu0 %v1489
      %v1512 = vpop.f32.mrf.mxu0
      %v1513 = vadd.f32 %v1486, %v1512
      %v1514 = vpop.f32.mrf.mxu0
      %1515 = vdwg.mxu0
      %v1516 = vmax.f32 %v1513, 0.0
      %s1517 = scalar_lea.vmem %s12, 32
      %v1518 = vld [vmem:[%s1517] sm:$0xff]
      %v1519 = vld [vmem:[%s1517 + $0x8] sm:$0xff]
      %v1520 = vld [vmem:[%s1517 + $0x10] sm:$0xff]
      %v1521 = vld [vmem:[%s1517 + $0x18] sm:$0xff]
      %v1522 = vpack.c.bf16 %v1516, %v1516
      %v1523 = vpack.c.bf16 %v1519, %v1518
      %v1524 = vpack.c.bf16 %v1521, %v1520
      %s1525 = scalar_lea.vmem %s13, 1
      %v1526 = vld [vmem:[%s1525] sm:$0x1]
      %v1528 = vperm.slane %v1526, 0
      %v1531 = vsel %vm1042, %v1522, 0
      %v1534 = vsel %vm1042, %v1523, 0
      %v1537 = vsel %vm1042, %v1524, 0
      %1539 = vmatpush.bf16.xpose.msra.mxu0 0
      %1540 = vmatpush.bf16.xpose.msra.mxu0 0
      %1541 = vmatpush.bf16.xpose.msra.mxu0 0
      %1542 = vmatpush.bf16.xpose.msra.mxu0 0
      %1543 = vmatpush.bf16.xpose.msra.mxu0 0
      %1544 = vmatpush.bf16.xpose.msra.mxu0 0
      %1545 = vmatpush.bf16.xpose.msra.mxu0 %v1537
      %1546 = vmatpush.bf16.xpose.msra.mxu0 %v1534
      %1547 = vmatmul.bf16.gmra.mxu0 %v1531
      %v1548 = vpop.f32.mrf.mxu0
      %v1549 = vadd.f32 %v1528, %v1548
      %v1550 = vpop.f32.mrf.mxu0
      %1551 = vdwg.mxu0
      %v1552 = vadd.f32 %v1468, %v1549
      %s1553 = scalar_lea.vmem %s14, 1
      %v1554 = vld [vmem:[%s1553] sm:$0x1]
      %s1555 = scalar_lea.vmem %s15, 1
      %v1556 = vld [vmem:[%s1555] sm:$0x1]
      %v1557 = vsel %vm632, %v1552, 0.0
      %1558 = vadd.xlane.f32.xlu0 %v1557
      %v1559 = vpop.xlane.xlu0 %1558
      %v1560 = vmul.f32 %v1559, %v957
      %v1561 = vsub.f32 %v1552, %v1560
      %v1562 = vmul.f32 %v1561, %v1561
      %v1563 = vsel %vm632, %v1562, 0.0
      %1564 = vadd.xlane.f32.xlu0 %v1563
      %v1565 = vpop.xlane.xlu0 %1564
      %v1566 = vmul.f32 %v1565, %v957
      %v1567 = vadd.f32 %v1566, 1e-05
      %v1568 = vrsqrt.pop %v1567
      %v1569 = vmul.f32 %v1568, %v1567
      %v1570 = vmul.f32 %v1569, %v1568
      %v1571 = vmul.f32 0.5, %v1570
      %v1572 = vsub.f32 1.5, %v1571
      %v1573 = vmul.f32 %v1568, %v1572
      %vm1574 = vweird.f32 %v1567
      %vm1575 = vweird.f32 %v1568
      %vm1576 = vmor %vm1574, %vm1575
      %v1577 = vsel %vm1576, %v1568, %v1573
      %v1578 = vmul.f32 %v1561, %v1577
      %v1580 = vperm.slane %v1554, 0
      %v1582 = vmul.f32 %v1578, %v1580
      %v1584 = vperm.slane %v1556, 0
      %v1586 = vadd.f32 %v1582, %v1584
      %v1587 = vld [vmem:[%s16] sm:$0xf]
      %v1588 = vpack.c.bf16 %v1586, %v1586
      %v1589 = vpack.c.bf16 %v1587, %v1587
      %v1590 = vld [vmem:[%s17] sm:$0x1]
      %v1592 = vperm.slane %v1590, 0
      %v1595 = vsel %vm632, %v1588, 0
      %v1598 = vsel %vm632, %v1589, 0
      %1600 = vmatpush.bf16.xpose.msra.mxu0 0
      %1601 = vmatpush.bf16.xpose.msra.mxu0 0
      %1602 = vmatpush.bf16.xpose.msra.mxu0 0
      %1603 = vmatpush.bf16.xpose.msra.mxu0 0
      %1604 = vmatpush.bf16.xpose.msra.mxu0 0
      %1605 = vmatpush.bf16.xpose.msra.mxu0 0
      %1606 = vmatpush.bf16.xpose.msra.mxu0 0
      %1607 = vmatpush.bf16.xpose.msra.mxu0 %v1598
      %1608 = vmatmul.bf16.gmra.mxu0 %v1595
      %v1609 = vpop.f32.mrf.mxu0
      %v1610 = vadd.f32 %v1592, %v1609
      %v1611 = vpop.f32.mrf.mxu0
      %1612 = vdwg.mxu0
      %vm1613 = vcmask 31744
      %1614 = vst.msk [vmem:[%s570] sm:$0xff] %vm1613, %v1610
      %p1615 = scmp.lt.s32.totalorder %s29, 1
      %s1616 = scalar_select %p1615, %s29, 1
      %s1617 = smul.addr %s1616, 8
      %s1618 = scalar_lea.vmem %s18, %s1617
      // Predicated region
      $region93: #{market_transformer_forward.1} parent=91 // pred_check
        %p1619 = pneg %p430
      $region94: #{market_transformer_forward.1} parent=91 // pred_check_branch
        %1621 = sbr.rel (%p1619) target = $region96
      $region95: #{market_transformer_forward.1} parent=91 // pred_region
        _
      $region96: #{market_transformer_forward.1} parent=91 // pred_fallthru
        _
    $region92: #{market_transformer_forward.1} parent=5 // pred_fallthru
      _
    %p1622 = scmp.le.s32.totalorder 2, %s24
    // Predicated region
    $region97: #{market_transformer_forward.1} parent=5 // pred_check
      %p1623 = pneg %p1622
    $region98: #{market_transformer_forward.1} parent=5 // pred_check_branch
      %1625 = sbr.rel (%p1623) target = $region100
    $region99: #{market_transformer_forward.1} parent=5 // pred_region
      %s1626 = ssub.s32 %s24, 2
      // Predicated region
      $region101: #{market_transformer_forward.1} parent=99 // pred_check
        %p1627 = pneg %p436
      $region102: #{market_transformer_forward.1} parent=99 // pred_check_branch
        %1629 = sbr.rel (%p1627) target = $region104
      $region103: #{market_transformer_forward.1} parent=99 // pred_region
        %p1630 = scmp.lt.s32.totalorder %s30, 1
        %s1631 = scalar_select %p1630, %s30, 1
        %s1632 = smul.addr %s1631, 8
        %s1633 = scalar_lea.vmem %s18, %s1632
      $region104: #{market_transformer_forward.1} parent=99 // pred_fallthru
        _
    $region100: #{market_transformer_forward.1} parent=5 // pred_fallthru
      _
  $region6: #{market_transformer_forward.1} parent=0 // loop_footer
    %s28 = sadd.s32 1, %s24
  $region7: #{market_transformer_forward.1} parent=0 // loop_footer_branch
    %23 = sbr.rel target = $region3
  $region8: #{market_transformer_forward.1} parent=0 // loop_exit
    _

</llo_original>
